<compile_context>
chip_gen: v7x
topology: tpu7x:2x2x1
jax: 0.10.0
libtpu: 0.0.40
codegen_flags: <defaults>
</compile_context>

<pallas_src>
import functools
import math

import jax
import jax.numpy as jnp
from jax import lax
from jax.experimental import pallas as pl
from jax.experimental.pallas import tpu as pltpu


def _round_up(a: int, b: int) -> int:
    return ((a + b - 1) // b) * b


def _device_kind() -> str:
    try:
        return jax.devices()[0].device_kind.lower()
    except Exception:
        return ""


def _tpu_plan():
    """Per-generation knobs: (num_tensorcores, vmem_limit_bytes, has_bf16_vpu)."""
    kind = _device_kind()
    is_v7 = ("v7" in kind) or ("tpu7" in kind)
    is_v6 = "v6" in kind
    is_v5 = "v5" in kind
    num_tc = 2 if is_v7 else 1                      # v5e/v6e: 1 TC; v7x: 2 TCs
    if is_v7:
        vmem = 48 * 1024 * 1024                     # 64 MiB physical per TC
    elif is_v6 or is_v5:
        vmem = 64 * 1024 * 1024                     # 128 MiB physical parts
    else:
        vmem = 32 * 1024 * 1024                     # conservative fallback
    has_bf16_vpu = is_v6 or is_v7                   # v5e has no bf16 VALU
    return num_tc, vmem, has_bf16_vpu


def _default_power_dtype(compute_dtype):
    if jnp.dtype(compute_dtype) == jnp.dtype(jnp.float32):
        return jnp.float32
    _, _, has_bf16_vpu = _tpu_plan()
    return compute_dtype if has_bf16_vpu else jnp.float32


# ----------------------------------------------------------------------------
# Pallas kernel: one tile of packed output rows.
#   out = bias + sum_p  (x**(p+1) tile) @ W_bd[p]       (q accumulated MXU dots)
# W_bd[p] is block-diagonal so the dot directly emits the lane-packed layout.
# ----------------------------------------------------------------------------
def _selfonn_kernel(patch_ref, w_ref, b_ref, o_ref, *, q: int, power_dtype,
                    mxu_dtype):
    x = patch_ref[...].astype(power_dtype)                    # (TMg, g*K)
    xp = x
    acc = jnp.dot(xp.astype(mxu_dtype), w_ref[0],
                  preferred_element_type=jnp.float32)         # (TMg, C_lane)
    for p in range(1, q):
        xp = xp * x                                           # VPU elementwise
        acc = acc + jnp.dot(xp.astype(mxu_dtype), w_ref[p],
                            preferred_element_type=jnp.float32)
    o_ref[...] = (acc + b_ref[...]).astype(o_ref.dtype)       # lane-dense store


def _choose_tile_mg(Mg, gK, C_lane, q, requested, in_isz, out_isz, pow_isz,
                    vmem_limit_bytes, num_tc):
    """Pick the packed-row tile: as large as possible, 16-row granularity,
    grid >= 2*num_tc only on multi-TC parts, stay inside the VMEM budget."""
    gran = 16                                     # bf16 sublane tile
    t = max(gran, min(_round_up(requested, gran), _round_up(Mg, gran)))
    if num_tc > 1:
        t = min(t, max(gran, _round_up(pl.cdiv(Mg, 2 * num_tc), gran)))
    budget = int(vmem_limit_bytes * 0.75)

    def footprint(tm):
        tile_in = 2 * tm * gK * in_isz                     # double-buffered input
        tile_out = 2 * tm * C_lane * out_isz               # double-buffered output
        wts = q * gK * C_lane * in_isz + C_lane * 4        # single-buffered resident
        temps = tm * gK * (2 * pow_isz + in_isz) + tm * C_lane * 4
        return tile_in + tile_out + wts + temps

    while t > gran and footprint(t) > budget:
        t = max(gran, _round_up(t // 2, gran))
    return t


def selfonn2d_fast(x, weight, bias, *, q, stride=(1, 1), padding=(1, 1),
                   dilation=(1, 1), tile_m=8192, compute_dtype=jnp.bfloat16,
                   power_dtype=None, out_dtype=None, vmem_limit_bytes=None,
                   return_nhwc=False):
    """x: (N, C_in, H, W) NCHW; weight: (C_out, q*C_in, KH, KW); bias: (C_out,) or None."""
    N, C_in, H, W = x.shape
    C_out, qc, KH, KW = weight.shape
    assert qc == q * C_in, "groups != 1 not supported"   # TODO(synk): grouped conv
    sh, sw = stride
    ph, pw = padding
    dh, dw = dilation
    H_out = (H + 2 * ph - dh * (KH - 1) - 1) // sh + 1
    W_out = (W + 2 * pw - dw * (KW - 1) - 1) // sw + 1

    num_tc, vmem_auto, _ = _tpu_plan()
    if vmem_limit_bytes is None:
        vmem_limit_bytes = vmem_auto
    if power_dtype is None:
        power_dtype = _default_power_dtype(compute_dtype)
    if out_dtype is None:
        out_dtype = compute_dtype

    # ---- output lane packing: g output pixels per 128-lane row --------------
    if C_out < 128:
        g = 128 // math.gcd(128, C_out)           # g*C_out = lcm(128, C_out)
        if g > 16:
            g = 1                                 # pathological C_out: plain pad
    else:
        g = 1
    C_grp = g * C_out
    C_lane = _round_up(C_grp, 128)                # lane width (pad only if g == 1)

    # ---- im2col, emitted directly in (N, Ho, Wo, Cin, KH*KW) order ----------
    x_nhwc = jnp.transpose(x, (0, 2, 3, 1))
    xpad = jnp.pad(x_nhwc, ((0, 0), (ph, ph), (pw, pw), (0, 0)))   # 'zeros' pad
    cols = [xpad[:, kh * dh:kh * dh + sh * H_out:sh,
                 kw * dw:kw * dw + sw * W_out:sw, :]
            for kh in range(KH) for kw in range(KW)]
    patches = jnp.stack(cols, axis=-1)                      # (N,Ho,Wo,Cin,KH*KW)
    M = N * H_out * W_out
    K = C_in * KH * KW
    patches = patches.reshape(M, K).astype(compute_dtype)   # bf16 -> half HBM

    in_isz = jnp.dtype(compute_dtype).itemsize
    out_isz = jnp.dtype(out_dtype).itemsize
    pow_isz = jnp.dtype(power_dtype).itemsize
    gK = g * K
    Mg = pl.cdiv(M, g)
    tile_mg = _choose_tile_mg(Mg, gK, C_lane, q, pl.cdiv(tile_m, g),
                              in_isz, out_isz, pow_isz, vmem_limit_bytes, num_tc)
    M_pad = _round_up(M, g * tile_mg)
    if M_pad != M:
        patches = jnp.pad(patches, ((0, M_pad - M), (0, 0)))   # zero rows, sliced off
    Mg_pad = M_pad // g
    patches = patches.reshape(Mg_pad, gK)                   # row-major, free reshape

    # ---- weights: fused (q, K, C_out) -> block-diagonal (q, g*K, C_lane) ----
    # channel dim of the module weight is ordered [pow1 chans, pow2 chans, ...].
    w_q = weight.reshape(C_out, q, C_in, KH, KW).transpose(1, 2, 3, 4, 0)
    w_q = w_q.reshape(q, K, C_out)                          # K ordered (cin, kh, kw)
    if g == 1:
        w_bd = jnp.pad(w_q, ((0, 0), (0, 0), (0, C_lane - C_out)))
    else:
        eye = jnp.eye(g, dtype=w_q.dtype)
        w_bd = jnp.einsum('pkc,gh->pgkhc', w_q, eye).reshape(q, gK, C_grp)
        if C_lane != C_grp:
            w_bd = jnp.pad(w_bd, ((0, 0), (0, 0), (0, C_lane - C_grp)))
    w_bd = w_bd.astype(compute_dtype)

    b = bias if bias is not None else jnp.zeros((C_out,), jnp.float32)
    b = jnp.tile(b.astype(jnp.float32), g)
    b = jnp.pad(b, (0, C_lane - C_grp)).reshape(1, C_lane)

    grid = (Mg_pad // tile_mg,)
    kern = functools.partial(_selfonn_kernel, q=q, power_dtype=power_dtype,
                             mxu_dtype=compute_dtype)

    def build(single_buffer_resident):
        res_kw = ({"pipeline_mode": pl.Buffered(1)}
                  if single_buffer_resident else {})
        return pl.pallas_call(
            kern,
            out_shape=jax.ShapeDtypeStruct((Mg_pad, C_lane), out_dtype),
            grid_spec=pltpu.PrefetchScalarGridSpec(
                num_scalar_prefetch=0,
                grid=grid,
                in_specs=[
                    pl.BlockSpec((tile_mg, gK), lambda i: (i, 0)),
                    pl.BlockSpec((q, gK, C_lane), lambda i: (0, 0, 0), **res_kw),
                    pl.BlockSpec((1, C_lane), lambda i: (0, 0), **res_kw),
                ],
                out_specs=pl.BlockSpec((tile_mg, C_lane), lambda i: (i, 0)),
            ),
            compiler_params=pltpu.CompilerParams(
                dimension_semantics=("parallel",),
                vmem_limit_bytes=vmem_limit_bytes),
        )

    try:
        out_flat = build(True)(patches, w_bd, b)
    except Exception:
        # This jax build rejects pipeline_mode=Buffered(1) on resident inputs:
        # fall back to the default double-buffered pipeline (same math).
        out_flat = build(False)(patches, w_bd, b)

    # ---- unpack the lane-packed output ---------------------------------------
    if g > 1:
        out = out_flat.reshape(Mg_pad * g, C_out)           # (M_pad, C_out)
    else:
        out = out_flat[:, :C_out]
    out = out[:M].reshape(N, H_out, W_out, C_out)
    if not return_nhwc:
        out = jnp.transpose(out, (0, 3, 1, 2))               # NCHW (module semantics)
    return out


# ----------------------------------------------------------------------------
# Pure-JAX reference.  store/power/mxu dtypes control where rounding happens so
# both the f32 and the bf16 kernel paths can be checked tightly.
# ----------------------------------------------------------------------------
def selfonn2d_ref(x, weight, bias, *, q, stride=(1, 1), padding=(1, 1),
                  dilation=(1, 1), store_dtype=jnp.float32,
                  power_dtype=jnp.float32, mxu_dtype=jnp.float32):
    xs = x.astype(store_dtype).astype(power_dtype)
    pows = []
    xp = xs
    for p in range(q):
        if p > 0:
            xp = xp * xs                       # iterative, same order as kernel
        pows.append(xp.astype(mxu_dtype))
    xq = jnp.concatenate(pows, axis=1)
    y = lax.conv_general_dilated(
        xq, weight.astype(mxu_dtype), window_strides=stride,
        padding=[(padding[0], padding[0]), (padding[1], padding[1])],
        rhs_dilation=dilation,
        dimension_numbers=("NCHW", "OIHW", "NCHW"),
        preferred_element_type=jnp.float32)
    if bias is not None:
        y = y + bias[None, :, None, None].astype(jnp.float32)
    return y


if __name__ == "__main__":
    # module config (SelfONN2d, mode='fast', groups=1, bias=True, no dropout)
    N, C_in, H, W = 2, 4, 16, 16
    C_out, KH, KW = 8, 3, 3
    q = 3
    stride, padding = (1, 1), (1, 1)

    key = jax.random.PRNGKey(0)
    kx, kw_, kb = jax.random.split(key, 3)

    x = jax.random.normal(kx, (N, C_in, H, W), dtype=jnp.float32)

    # reset_parameters(): xavier_uniform with tanh gain, uniform bias
    fan_in = (q * C_in) * KH * KW
    fan_out = C_out * KH * KW
    gain = 5.0 / 3.0  # calculate_gain('tanh')
    w_bound = gain * math.sqrt(6.0 / (fan_in + fan_out))
    weight = jax.random.uniform(kw_, (C_out, q * C_in, KH, KW),
                                minval=-w_bound, maxval=w_bound,
                                dtype=jnp.float32)
    b_bound = 1.0 / math.sqrt(fan_in)
    bias = jax.random.uniform(kb, (C_out,), minval=-b_bound, maxval=b_bound,
                              dtype=jnp.float32)

    # --- f32 operand path: strict check against the f32 reference ------------
    y32 = selfonn2d_fast(x, weight, bias, q=q, stride=stride, padding=padding,
                         compute_dtype=jnp.float32)
    y32 = jax.block_until_ready(y32)
    ref32 = selfonn2d_ref(x, weight, bias, q=q, stride=stride, padding=padding)
    assert y32.shape == (N, C_out, H, W)
    assert jnp.allclose(y32.astype(jnp.float32), ref32, atol=1e-3, rtol=1e-3), \
        float(jnp.max(jnp.abs(y32.astype(jnp.float32) - ref32)))

    # --- bf16 MXU path (default / production): matching rounding points ------
    pdt = _default_power_dtype(jnp.bfloat16)
    y16 = selfonn2d_fast(x, weight, bias, q=q, stride=stride, padding=padding,
                         compute_dtype=jnp.bfloat16)
    y16 = jax.block_until_ready(y16)
    ref16 = selfonn2d_ref(x, weight, bias, q=q, stride=stride, padding=padding,
                          store_dtype=jnp.bfloat16, power_dtype=pdt,
                          mxu_dtype=jnp.bfloat16)
    assert jnp.allclose(y16.astype(jnp.float32), ref16, atol=5e-2, rtol=1e-2), \
        float(jnp.max(jnp.abs(y16.astype(jnp.float32) - ref16)))

    print("KERNEL_OK")
</pallas_src>

<mosaic_0001>
module attributes {stable_mosaic.version = 11 : i64} {
  func.func @_selfonn_kernel(%arg0: i32, %arg1: memref<32x576xf32, #tpu.memory_space<vmem>>, %arg2: memref<3x576x128xf32, #tpu.memory_space<vmem>>, %arg3: memref<1x128xf32, #tpu.memory_space<vmem>>, %arg4: memref<32x128xf32, #tpu.memory_space<vmem>>) attributes {dimension_semantics = [#tpu.dimension_semantics<parallel>], iteration_bounds = array<i64: 1>, scalar_prefetch = 0 : i64, scratch_operands = 0 : i64, tpu.core_type = #tpu.core_type<tc>, window_params = [{transform_indices = @transform_0, window_bounds = array<i64: 32, 576>}, {pipeline_mode = #tpu.pipeline_mode<synchronous>, transform_indices = @transform_1, window_bounds = array<i64: 3, 576, 128>}, {pipeline_mode = #tpu.pipeline_mode<synchronous>, transform_indices = @transform_2, window_bounds = array<i64: 1, 128>}, {transform_indices = @transform_3, window_bounds = array<i64: 32, 128>}]} {
    %c0 = arith.constant 0 : index
    %c0_0 = arith.constant 0 : index
    %0 = vector.load %arg1[%c0, %c0_0] : memref<32x576xf32, #tpu.memory_space<vmem>>, vector<32x576xf32>
    %c0_1 = arith.constant 0 : index
    %c0_2 = arith.constant 0 : index
    %c0_3 = arith.constant 0 : index
    %1 = vector.load %arg2[%c0_1, %c0_2, %c0_3] : memref<3x576x128xf32, #tpu.memory_space<vmem>>, vector<1x576x128xf32>
    %2 = vector.shape_cast %1 : vector<1x576x128xf32> to vector<576x128xf32>
    %cst = arith.constant dense<0.000000e+00> : vector<32x128xf32>
    %3 = tpu.matmul %0, %2, %cst {dimension_numbers = #tpu.dot_dimension_numbers<[1], [0], [0], [1], [0, 0, 1, 1], [], []>} : vector<32x576xf32>, vector<576x128xf32>, vector<32x128xf32> -> vector<32x128xf32>
    %4 = arith.mulf %0, %0 : vector<32x576xf32>
    %c1 = arith.constant 1 : index
    %c0_4 = arith.constant 0 : index
    %c0_5 = arith.constant 0 : index
    %5 = vector.load %arg2[%c1, %c0_4, %c0_5] : memref<3x576x128xf32, #tpu.memory_space<vmem>>, vector<1x576x128xf32>
    %6 = vector.shape_cast %5 : vector<1x576x128xf32> to vector<576x128xf32>
    %cst_6 = arith.constant dense<0.000000e+00> : vector<32x128xf32>
    %7 = tpu.matmul %4, %6, %cst_6 {dimension_numbers = #tpu.dot_dimension_numbers<[1], [0], [0], [1], [0, 0, 1, 1], [], []>} : vector<32x576xf32>, vector<576x128xf32>, vector<32x128xf32> -> vector<32x128xf32>
    %8 = arith.addf %3, %7 : vector<32x128xf32>
    %9 = arith.mulf %4, %0 : vector<32x576xf32>
    %c2 = arith.constant 2 : index
    %c0_7 = arith.constant 0 : index
    %c0_8 = arith.constant 0 : index
    %10 = vector.load %arg2[%c2, %c0_7, %c0_8] : memref<3x576x128xf32, #tpu.memory_space<vmem>>, vector<1x576x128xf32>
    %11 = vector.shape_cast %10 : vector<1x576x128xf32> to vector<576x128xf32>
    %cst_9 = arith.constant dense<0.000000e+00> : vector<32x128xf32>
    %12 = tpu.matmul %9, %11, %cst_9 {dimension_numbers = #tpu.dot_dimension_numbers<[1], [0], [0], [1], [0, 0, 1, 1], [], []>} : vector<32x576xf32>, vector<576x128xf32>, vector<32x128xf32> -> vector<32x128xf32>
    %13 = arith.addf %8, %12 : vector<32x128xf32>
    %c0_10 = arith.constant 0 : index
    %c0_11 = arith.constant 0 : index
    %14 = vector.load %arg3[%c0_10, %c0_11] : memref<1x128xf32, #tpu.memory_space<vmem>>, vector<1x128xf32>
    %15 = vector.broadcast %14 : vector<1x128xf32> to vector<32x128xf32>
    %16 = arith.addf %13, %15 : vector<32x128xf32>
    %c0_12 = arith.constant 0 : index
    %c0_13 = arith.constant 0 : index
    %17 = vector.load %arg4[%c0_12, %c0_13] : memref<32x128xf32, #tpu.memory_space<vmem>>, vector<32x128xf32>
    tpu.vector_store %arg4[%c0_12, %c0_13], %16 {strides = array<i32>} : memref<32x128xf32, #tpu.memory_space<vmem>>, vector<32x128xf32>,
    return
  }
  func.func @transform_0(%arg0: i32) -> (i32, i32) {
    %c0_i32 = arith.constant 0 : i32
    %c0_i32_0 = arith.constant 0 : i32
    return %arg0, %c0_i32 : i32, i32
  }
  func.func @transform_1(%arg0: i32) -> (i32, i32, i32) {
    %c0_i32 = arith.constant 0 : i32
    %c0_i32_0 = arith.constant 0 : i32
    %c0_i32_1 = arith.constant 0 : i32
    %c0_i32_2 = arith.constant 0 : i32
    return %c0_i32, %c0_i32_0, %c0_i32_1 : i32, i32, i32
  }
  func.func @transform_2(%arg0: i32) -> (i32, i32) {
    %c0_i32 = arith.constant 0 : i32
    %c0_i32_0 = arith.constant 0 : i32
    %c0_i32_1 = arith.constant 0 : i32
    return %c0_i32, %c0_i32_0 : i32, i32
  }
  func.func @transform_3(%arg0: i32) -> (i32, i32) {
    %c0_i32 = arith.constant 0 : i32
    %c0_i32_0 = arith.constant 0 : i32
    return %arg0, %c0_i32 : i32, i32
  }
}

module attributes {stable_mosaic.version = 11 : i64} {
  func.func @_selfonn_kernel(%arg0: i32, %arg1: memref<32x576xf32, #tpu.memory_space<vmem>>, %arg2: memref<3x576x128xf32, #tpu.memory_space<vmem>>, %arg3: memref<1x128xf32, #tpu.memory_space<vmem>>, %arg4: memref<32x128xf32, #tpu.memory_space<vmem>>) attributes {dimension_semantics = [#tpu.dimension_semantics<parallel>], iteration_bounds = array<i64: 1>, scalar_prefetch = 0 : i64, scratch_operands = 0 : i64, tpu.core_type = #tpu.core_type<tc>, window_params = [{transform_indices = @transform_0, window_bounds = array<i64: 32, 576>}, {pipeline_mode = #tpu.pipeline_mode<synchronous>, transform_indices = @transform_1, window_bounds = array<i64: 3, 576, 128>}, {pipeline_mode = #tpu.pipeline_mode<synchronous>, transform_indices = @transform_2, window_bounds = array<i64: 1, 128>}, {transform_indices = @transform_3, window_bounds = array<i64: 32, 128>}]} {
    %c0 = arith.constant 0 : index
    %c0_0 = arith.constant 0 : index
    %0 = vector.load %arg1[%c0, %c0_0] : memref<32x576xf32, #tpu.memory_space<vmem>>, vector<32x576xf32>
    %c0_1 = arith.constant 0 : index
    %c0_2 = arith.constant 0 : index
    %c0_3 = arith.constant 0 : index
    %1 = vector.load %arg2[%c0_1, %c0_2, %c0_3] : memref<3x576x128xf32, #tpu.memory_space<vmem>>, vector<1x576x128xf32>
    %2 = vector.shape_cast %1 : vector<1x576x128xf32> to vector<576x128xf32>
    %cst = arith.constant dense<0.000000e+00> : vector<32x128xf32>
    %3 = tpu.matmul %0, %2, %cst {dimension_numbers = #tpu.dot_dimension_numbers<[1], [0], [0], [1], [0, 0, 1, 1], [], []>} : vector<32x576xf32>, vector<576x128xf32>, vector<32x128xf32> -> vector<32x128xf32>
    %4 = arith.mulf %0, %0 : vector<32x576xf32>
    %c1 = arith.constant 1 : index
    %c0_4 = arith.constant 0 : index
    %c0_5 = arith.constant 0 : index
    %5 = vector.load %arg2[%c1, %c0_4, %c0_5] : memref<3x576x128xf32, #tpu.memory_space<vmem>>, vector<1x576x128xf32>
    %6 = vector.shape_cast %5 : vector<1x576x128xf32> to vector<576x128xf32>
    %cst_6 = arith.constant dense<0.000000e+00> : vector<32x128xf32>
    %7 = tpu.matmul %4, %6, %cst_6 {dimension_numbers = #tpu.dot_dimension_numbers<[1], [0], [0], [1], [0, 0, 1, 1], [], []>} : vector<32x576xf32>, vector<576x128xf32>, vector<32x128xf32> -> vector<32x128xf32>
    %8 = arith.addf %3, %7 : vector<32x128xf32>
    %9 = arith.mulf %4, %0 : vector<32x576xf32>
    %c2 = arith.constant 2 : index
    %c0_7 = arith.constant 0 : index
    %c0_8 = arith.constant 0 : index
    %10 = vector.load %arg2[%c2, %c0_7, %c0_8] : memref<3x576x128xf32, #tpu.memory_space<vmem>>, vector<1x576x128xf32>
    %11 = vector.shape_cast %10 : vector<1x576x128xf32> to vector<576x128xf32>
    %cst_9 = arith.constant dense<0.000000e+00> : vector<32x128xf32>
    %12 = tpu.matmul %9, %11, %cst_9 {dimension_numbers = #tpu.dot_dimension_numbers<[1], [0], [0], [1], [0, 0, 1, 1], [], []>} : vector<32x576xf32>, vector<576x128xf32>, vector<32x128xf32> -> vector<32x128xf32>
    %13 = arith.addf %8, %12 : vector<32x128xf32>
    %c0_10 = arith.constant 0 : index
    %c0_11 = arith.constant 0 : index
    %14 = vector.load %arg3[%c0_10, %c0_11] : memref<1x128xf32, #tpu.memory_space<vmem>>, vector<1x128xf32>
    %15 = vector.broadcast %14 : vector<1x128xf32> to vector<32x128xf32>
    %16 = arith.addf %13, %15 : vector<32x128xf32>
    %c0_12 = arith.constant 0 : index
    %c0_13 = arith.constant 0 : index
    %17 = vector.load %arg4[%c0_12, %c0_13] : memref<32x128xf32, #tpu.memory_space<vmem>>, vector<32x128xf32>
    tpu.vector_store %arg4[%c0_12, %c0_13], %16 {strides = array<i32>} : memref<32x128xf32, #tpu.memory_space<vmem>>, vector<32x128xf32>,
    return
  }
  func.func @transform_0(%arg0: i32) -> (i32, i32) {
    %c0_i32 = arith.constant 0 : i32
    %c0_i32_0 = arith.constant 0 : i32
    return %arg0, %c0_i32 : i32, i32
  }
  func.func @transform_1(%arg0: i32) -> (i32, i32, i32) {
    %c0_i32 = arith.constant 0 : i32
    %c0_i32_0 = arith.constant 0 : i32
    %c0_i32_1 = arith.constant 0 : i32
    %c0_i32_2 = arith.constant 0 : i32
    return %c0_i32, %c0_i32_0, %c0_i32_1 : i32, i32, i32
  }
  func.func @transform_2(%arg0: i32) -> (i32, i32) {
    %c0_i32 = arith.constant 0 : i32
    %c0_i32_0 = arith.constant 0 : i32
    %c0_i32_1 = arith.constant 0 : i32
    return %c0_i32, %c0_i32_0 : i32, i32
  }
  func.func @transform_3(%arg0: i32) -> (i32, i32) {
    %c0_i32 = arith.constant 0 : i32
    %c0_i32_0 = arith.constant 0 : i32
    return %arg0, %c0_i32 : i32, i32
  }
}

</mosaic_0001>

<llo_original>
// kernel: tpu_custom_call.1
$region0: #{tpu_custom_call.1}
  #allocation0 [shape = 'u32[]', space=smem, size = 0x4, offset = 0x4, fixed_abs, tag = 'smem constant byte address 0x4 - core index']
  #allocation1 [shape = 'u32[144,128]{1,0:T(1,128)}', space=vmem, size = 0x12000, scoped, tag = 'internal scratch']
  %s0 = inlined_call_operand.hbm [shape: f32[32,576], index: 0, kind: input, shape index: {}]
  %s1 = inlined_call_operand.hbm [shape: f32[3,576,128], index: 1, kind: input, shape index: {}]
  %s2 = inlined_call_operand.vmem [shape: f32[1,128], index: 2, kind: input, shape index: {}]
  %s3 = inlined_call_operand.hbm [shape: f32[32,128], index: 3, kind: output, shape index: {}]
  %s4 = sld [smem:[#allocation0]]
  $region30: #{tpu_custom_call.1} parent=0
    _
  %s6 = ssub.s32 1, %s4
  %s7 = scalar_select 0, %s6, %s4
  $region1: #{tpu_custom_call.1} parent=0
    #allocation2 [shape = 'u8[81920]{0}', space=vmem, size = 0x14000, scoped, tag = 'input window, operand 0, single buffered']
    #allocation3 [shape = 's32[1]{0}', space=sflag, size = 0x4, scoped, tag = 'scoped memory for tpu_custom_call.1']
    #allocation4 [shape = 's32[1]{0}', space=sflag, size = 0x4, scoped, tag = 'scoped memory for tpu_custom_call.1']
    #allocation5 [shape = 'u8[884736]{0}', space=vmem, size = 0xd8000, scoped, tag = 'input window, operand 1, single buffered']
    #allocation6 [shape = 's32[1]{0}', space=sflag, size = 0x4, scoped, tag = 'scoped memory for tpu_custom_call.1']
    #allocation7 [shape = 'u8[16384]{0}', space=vmem, size = 0x4000, scoped, tag = 'output window, operand 0, single buffered']
    %8 = vsyncpa [#allocation3], 0
    %9 = vsyncpa [#allocation6], 0
    %10 = vsyncpa [#allocation4], 0
    // Predicated region
    $region2: #{tpu_custom_call.1} parent=1 // pred_check
      _
    $region3: #{tpu_custom_call.1} parent=1 // pred_check_branch
      %12 = sbr.rel (0) target = $region5
    $region4: #{tpu_custom_call.1} parent=1 // pred_region
      %s14 = ssub.s32 2560, 2560
      %15 = vsyncadd [#allocation3], %s14
      %s16 = sshll.u32 [#allocation2], 4
      %s17 = int_to_ptr.vmem [resolvable:$true] %s16
      %22 = dma.hbm_to_vmem [thread:$0]  %s0, 2560, %s17, [#allocation3], 640, 640, 40
    $region5: #{tpu_custom_call.1} parent=1 // pred_fallthru
      _
    // Predicated region
    $region6: #{tpu_custom_call.1} parent=1 // pred_check
      _
    $region7: #{tpu_custom_call.1} parent=1 // pred_check_branch
      %24 = sbr.rel (0) target = $region9
    $region8: #{tpu_custom_call.1} parent=1 // pred_region
      %s26 = ssub.s32 27648, 27648
      %27 = vsyncadd [#allocation6], %s26
      %s28 = sshll.u32 [#allocation5], 4
      %s29 = int_to_ptr.vmem [resolvable:$true] %s28
      %34 = dma.hbm_to_vmem [thread:$0]  %s1, 27648, %s29, [#allocation6], 128, 128, 8
    $region9: #{tpu_custom_call.1} parent=1 // pred_fallthru
      _
    // Predicated region
    $region10: #{tpu_custom_call.1} parent=1 // pred_check
      _
    $region11: #{tpu_custom_call.1} parent=1 // pred_check_branch
      %36 = sbr.rel (0) target = $region13
    $region12: #{tpu_custom_call.1} parent=1 // pred_region
      _
    $region13: #{tpu_custom_call.1} parent=1 // pred_fallthru
      _
    // Predicated region
    $region14: #{tpu_custom_call.1} parent=1 // pred_check
      _
    $region15: #{tpu_custom_call.1} parent=1 // pred_check_branch
      %38 = sbr.rel (0) target = $region17
    $region16: #{tpu_custom_call.1} parent=1 // pred_region
      %39 = dma.done [#allocation3], 2560
    $region17: #{tpu_custom_call.1} parent=1 // pred_fallthru
      _
    // Predicated region
    $region18: #{tpu_custom_call.1} parent=1 // pred_check
      _
    $region19: #{tpu_custom_call.1} parent=1 // pred_check_branch
      %41 = sbr.rel (0) target = $region21
    $region20: #{tpu_custom_call.1} parent=1 // pred_region
      %42 = dma.done [#allocation6], 27648
    $region21: #{tpu_custom_call.1} parent=1 // pred_fallthru
      _
    %v43 = vld [vmem:[#allocation2] sm:$0xff]
    %v44 = vld [vmem:[#allocation2 + $0x8] sm:$0xff]
    %v45 = vld [vmem:[#allocation2 + $0x10] sm:$0xff]
    %v46 = vld [vmem:[#allocation2 + $0x18] sm:$0xff]
    %v47 = vld [vmem:[#allocation2 + $0x20] sm:$0xff]
    %v48 = vld [vmem:[#allocation2 + $0x28] sm:$0xff]
    %v49 = vld [vmem:[#allocation2 + $0x30] sm:$0xff]
    %v50 = vld [vmem:[#allocation2 + $0x38] sm:$0xff]
    %v51 = vld [vmem:[#allocation2 + $0x40] sm:$0xff]
    %v52 = vld [vmem:[#allocation2 + $0x48] sm:$0xff]
    %v53 = vld [vmem:[#allocation2 + $0x50] sm:$0xff]
    %v54 = vld [vmem:[#allocation2 + $0x58] sm:$0xff]
    %v55 = vld [vmem:[#allocation2 + $0x60] sm:$0xff]
    %v56 = vld [vmem:[#allocation2 + $0x68] sm:$0xff]
    %v57 = vld [vmem:[#allocation2 + $0x70] sm:$0xff]
    %v58 = vld [vmem:[#allocation2 + $0x78] sm:$0xff]
    %v59 = vld [vmem:[#allocation2 + $0x80] sm:$0xff]
    %v60 = vld [vmem:[#allocation2 + $0x88] sm:$0xff]
    %v61 = vld [vmem:[#allocation2 + $0x90] sm:$0xff]
    %v62 = vld [vmem:[#allocation2 + $0x98] sm:$0xff]
    %v63 = vld [vmem:[#allocation5] sm:$0xff]
    %v64 = vld [vmem:[#allocation5 + $0x8] sm:$0xff]
    %v65 = vld [vmem:[#allocation5 + $0x10] sm:$0xff]
    %v66 = vld [vmem:[#allocation5 + $0x18] sm:$0xff]
    %v67 = vld [vmem:[#allocation5 + $0x20] sm:$0xff]
    %v68 = vld [vmem:[#allocation5 + $0x28] sm:$0xff]
    %v69 = vld [vmem:[#allocation5 + $0x30] sm:$0xff]
    %v70 = vld [vmem:[#allocation5 + $0x38] sm:$0xff]
    %v71 = vld [vmem:[#allocation5 + $0x40] sm:$0xff]
    %v72 = vld [vmem:[#allocation5 + $0x48] sm:$0xff]
    %v73 = vld [vmem:[#allocation5 + $0x50] sm:$0xff]
    %v74 = vld [vmem:[#allocation5 + $0x58] sm:$0xff]
    %v75 = vld [vmem:[#allocation5 + $0x60] sm:$0xff]
    %v76 = vld [vmem:[#allocation5 + $0x68] sm:$0xff]
    %v77 = vld [vmem:[#allocation5 + $0x70] sm:$0xff]
    %v78 = vld [vmem:[#allocation5 + $0x78] sm:$0xff]
    %v79 = vld [vmem:[#allocation5 + $0x80] sm:$0xff]
    %v80 = vld [vmem:[#allocation5 + $0x88] sm:$0xff]
    %v81 = vld [vmem:[#allocation5 + $0x90] sm:$0xff]
    %v82 = vld [vmem:[#allocation5 + $0x98] sm:$0xff]
    %v83 = vld [vmem:[#allocation5 + $0xa0] sm:$0xff]
    %v84 = vld [vmem:[#allocation5 + $0xa8] sm:$0xff]
    %v85 = vld [vmem:[#allocation5 + $0xb0] sm:$0xff]
    %v86 = vld [vmem:[#allocation5 + $0xb8] sm:$0xff]
    %v87 = vld [vmem:[#allocation5 + $0xc0] sm:$0xff]
    %v88 = vld [vmem:[#allocation5 + $0xc8] sm:$0xff]
    %v89 = vld [vmem:[#allocation5 + $0xd0] sm:$0xff]
    %v90 = vld [vmem:[#allocation5 + $0xd8] sm:$0xff]
    %v91 = vld [vmem:[#allocation5 + $0xe0] sm:$0xff]
    %v92 = vld [vmem:[#allocation5 + $0xe8] sm:$0xff]
    %v93 = vld [vmem:[#allocation5 + $0xf0] sm:$0xff]
    %v94 = vld [vmem:[#allocation5 + $0xf8] sm:$0xff]
    %v95 = vld [vmem:[#allocation5 + $0x100] sm:$0xff]
    %v96 = vld [vmem:[#allocation5 + $0x108] sm:$0xff]
    %v97 = vld [vmem:[#allocation5 + $0x110] sm:$0xff]
    %v98 = vld [vmem:[#allocation5 + $0x118] sm:$0xff]
    %v99 = vld [vmem:[#allocation5 + $0x120] sm:$0xff]
    %v100 = vld [vmem:[#allocation5 + $0x128] sm:$0xff]
    %v101 = vld [vmem:[#allocation5 + $0x130] sm:$0xff]
    %v102 = vld [vmem:[#allocation5 + $0x138] sm:$0xff]
    %v103 = vld [vmem:[#allocation5 + $0x140] sm:$0xff]
    %v104 = vld [vmem:[#allocation5 + $0x148] sm:$0xff]
    %v105 = vld [vmem:[#allocation5 + $0x150] sm:$0xff]
    %v106 = vld [vmem:[#allocation5 + $0x158] sm:$0xff]
    %v107 = vld [vmem:[#allocation5 + $0x160] sm:$0xff]
    %v108 = vld [vmem:[#allocation5 + $0x168] sm:$0xff]
    %v109 = vld [vmem:[#allocation5 + $0x170] sm:$0xff]
    %v110 = vld [vmem:[#allocation5 + $0x178] sm:$0xff]
    %v111 = vld [vmem:[#allocation5 + $0x180] sm:$0xff]
    %v112 = vld [vmem:[#allocation5 + $0x188] sm:$0xff]
    %v113 = vld [vmem:[#allocation5 + $0x190] sm:$0xff]
    %v114 = vld [vmem:[#allocation5 + $0x198] sm:$0xff]
    %v115 = vld [vmem:[#allocation5 + $0x1a0] sm:$0xff]
    %v116 = vld [vmem:[#allocation5 + $0x1a8] sm:$0xff]
    %v117 = vld [vmem:[#allocation5 + $0x1b0] sm:$0xff]
    %v118 = vld [vmem:[#allocation5 + $0x1b8] sm:$0xff]
    %v119 = vld [vmem:[#allocation5 + $0x1c0] sm:$0xff]
    %v120 = vld [vmem:[#allocation5 + $0x1c8] sm:$0xff]
    %v121 = vld [vmem:[#allocation5 + $0x1d0] sm:$0xff]
    %v122 = vld [vmem:[#allocation5 + $0x1d8] sm:$0xff]
    %v123 = vld [vmem:[#allocation5 + $0x1e0] sm:$0xff]
    %v124 = vld [vmem:[#allocation5 + $0x1e8] sm:$0xff]
    %v125 = vld [vmem:[#allocation5 + $0x1f0] sm:$0xff]
    %v126 = vld [vmem:[#allocation5 + $0x1f8] sm:$0xff]
    %v127 = vld [vmem:[#allocation5 + $0x200] sm:$0xff]
    %v128 = vld [vmem:[#allocation5 + $0x208] sm:$0xff]
    %v129 = vld [vmem:[#allocation5 + $0x210] sm:$0xff]
    %v130 = vld [vmem:[#allocation5 + $0x218] sm:$0xff]
    %v131 = vld [vmem:[#allocation5 + $0x220] sm:$0xff]
    %v132 = vld [vmem:[#allocation5 + $0x228] sm:$0xff]
    %v133 = vld [vmem:[#allocation5 + $0x230] sm:$0xff]
    %v134 = vld [vmem:[#allocation5 + $0x238] sm:$0xff]
    %v135 = vmul.f32 %v43, %v43
    %v136 = vmul.f32 %v44, %v44
    %v137 = vmul.f32 %v45, %v45
    %v138 = vmul.f32 %v46, %v46
    %v139 = vmul.f32 %v47, %v47
    %v140 = vmul.f32 %v48, %v48
    %v141 = vmul.f32 %v49, %v49
    %v142 = vmul.f32 %v50, %v50
    %v143 = vmul.f32 %v51, %v51
    %v144 = vmul.f32 %v52, %v52
    %v145 = vmul.f32 %v53, %v53
    %v146 = vmul.f32 %v54, %v54
    %v147 = vmul.f32 %v55, %v55
    %v148 = vmul.f32 %v56, %v56
    %v149 = vmul.f32 %v57, %v57
    %v150 = vmul.f32 %v58, %v58
    %v151 = vmul.f32 %v59, %v59
    %v152 = vmul.f32 %v60, %v60
    %v153 = vmul.f32 %v61, %v61
    %v154 = vmul.f32 %v62, %v62
    %s155 = scalar_lea.vmem [#allocation5], 576
    %v156 = vld [vmem:[%s155] sm:$0xff]
    %v157 = vld [vmem:[%s155 + $0x8] sm:$0xff]
    %v158 = vld [vmem:[%s155 + $0x10] sm:$0xff]
    %v159 = vld [vmem:[%s155 + $0x18] sm:$0xff]
    %v160 = vld [vmem:[%s155 + $0x20] sm:$0xff]
    %v161 = vld [vmem:[%s155 + $0x28] sm:$0xff]
    %v162 = vld [vmem:[%s155 + $0x30] sm:$0xff]
    %v163 = vld [vmem:[%s155 + $0x38] sm:$0xff]
    %v164 = vld [vmem:[%s155 + $0x40] sm:$0xff]
    %v165 = vld [vmem:[%s155 + $0x48] sm:$0xff]
    %v166 = vld [vmem:[%s155 + $0x50] sm:$0xff]
    %v167 = vld [vmem:[%s155 + $0x58] sm:$0xff]
    %v168 = vld [vmem:[%s155 + $0x60] sm:$0xff]
    %v169 = vld [vmem:[%s155 + $0x68] sm:$0xff]
    %v170 = vld [vmem:[%s155 + $0x70] sm:$0xff]
    %v171 = vld [vmem:[%s155 + $0x78] sm:$0xff]
    %v172 = vld [vmem:[%s155 + $0x80] sm:$0xff]
    %v173 = vld [vmem:[%s155 + $0x88] sm:$0xff]
    %v174 = vld [vmem:[%s155 + $0x90] sm:$0xff]
    %v175 = vld [vmem:[%s155 + $0x98] sm:$0xff]
    %v176 = vld [vmem:[%s155 + $0xa0] sm:$0xff]
    %v177 = vld [vmem:[%s155 + $0xa8] sm:$0xff]
    %v178 = vld [vmem:[%s155 + $0xb0] sm:$0xff]
    %v179 = vld [vmem:[%s155 + $0xb8] sm:$0xff]
    %v180 = vld [vmem:[%s155 + $0xc0] sm:$0xff]
    %v181 = vld [vmem:[%s155 + $0xc8] sm:$0xff]
    %v182 = vld [vmem:[%s155 + $0xd0] sm:$0xff]
    %v183 = vld [vmem:[%s155 + $0xd8] sm:$0xff]
    %v184 = vld [vmem:[%s155 + $0xe0] sm:$0xff]
    %v185 = vld [vmem:[%s155 + $0xe8] sm:$0xff]
    %v186 = vld [vmem:[%s155 + $0xf0] sm:$0xff]
    %v187 = vld [vmem:[%s155 + $0xf8] sm:$0xff]
    %v188 = vld [vmem:[%s155 + $0x100] sm:$0xff]
    %v189 = vld [vmem:[%s155 + $0x108] sm:$0xff]
    %v190 = vld [vmem:[%s155 + $0x110] sm:$0xff]
    %v191 = vld [vmem:[%s155 + $0x118] sm:$0xff]
    %v192 = vld [vmem:[%s155 + $0x120] sm:$0xff]
    %v193 = vld [vmem:[%s155 + $0x128] sm:$0xff]
    %v194 = vld [vmem:[%s155 + $0x130] sm:$0xff]
    %v195 = vld [vmem:[%s155 + $0x138] sm:$0xff]
    %v196 = vld [vmem:[%s155 + $0x140] sm:$0xff]
    %v197 = vld [vmem:[%s155 + $0x148] sm:$0xff]
    %v198 = vld [vmem:[%s155 + $0x150] sm:$0xff]
    %v199 = vld [vmem:[%s155 + $0x158] sm:$0xff]
    %v200 = vld [vmem:[%s155 + $0x160] sm:$0xff]
    %v201 = vld [vmem:[%s155 + $0x168] sm:$0xff]
    %v202 = vld [vmem:[%s155 + $0x170] sm:$0xff]
    %v203 = vld [vmem:[%s155 + $0x178] sm:$0xff]
    %v204 = vld [vmem:[%s155 + $0x180] sm:$0xff]
    %v205 = vld [vmem:[%s155 + $0x188] sm:$0xff]
    %v206 = vld [vmem:[%s155 + $0x190] sm:$0xff]
    %v207 = vld [vmem:[%s155 + $0x198] sm:$0xff]
    %v208 = vld [vmem:[%s155 + $0x1a0] sm:$0xff]
    %v209 = vld [vmem:[%s155 + $0x1a8] sm:$0xff]
    %v210 = vld [vmem:[%s155 + $0x1b0] sm:$0xff]
    %v211 = vld [vmem:[%s155 + $0x1b8] sm:$0xff]
    %v212 = vld [vmem:[%s155 + $0x1c0] sm:$0xff]
    %v213 = vld [vmem:[%s155 + $0x1c8] sm:$0xff]
    %v214 = vld [vmem:[%s155 + $0x1d0] sm:$0xff]
    %v215 = vld [vmem:[%s155 + $0x1d8] sm:$0xff]
    %v216 = vld [vmem:[%s155 + $0x1e0] sm:$0xff]
    %v217 = vld [vmem:[%s155 + $0x1e8] sm:$0xff]
    %v218 = vld [vmem:[%s155 + $0x1f0] sm:$0xff]
    %v219 = vld [vmem:[%s155 + $0x1f8] sm:$0xff]
    %v220 = vld [vmem:[%s155 + $0x200] sm:$0xff]
    %v221 = vld [vmem:[%s155 + $0x208] sm:$0xff]
    %v222 = vld [vmem:[%s155 + $0x210] sm:$0xff]
    %v223 = vld [vmem:[%s155 + $0x218] sm:$0xff]
    %v224 = vld [vmem:[%s155 + $0x220] sm:$0xff]
    %v225 = vld [vmem:[%s155 + $0x228] sm:$0xff]
    %v226 = vld [vmem:[%s155 + $0x230] sm:$0xff]
    %v227 = vld [vmem:[%s155 + $0x238] sm:$0xff]
    %vm228 = vcmask 523264
    %v230 = vsel %vm228, %v139, 0
    %v233 = vsel %vm228, %v144, 0
    %v236 = vsel %vm228, %v149, 0
    %v239 = vsel %vm228, %v154, 0
    %241 = vmatprep.subr.mxu0 0.0
    %242 = vmatpush1.msra.mxu0 %v156
    %243 = vmatprep.subr.mxu0 0.0
    %244 = vmatpush1.msra.mxu0 %v157
    %245 = vmatprep.subr.mxu0 0.0
    %246 = vmatpush1.msra.mxu0 %v158
    %247 = vmatprep.subr.mxu0 0.0
    %248 = vmatpush1.msra.mxu0 %v159
    %249 = vmatprep.subr.mxu0 0.0
    %250 = vmatpush1.msra.mxu0 %v160
    %251 = vmatprep.subr.mxu0 0.0
    %252 = vmatpush1.msra.mxu0 %v161
    %253 = vmatprep.subr.mxu0 0.0
    %254 = vmatpush1.msra.mxu0 %v162
    %255 = vmatprep.subr.mxu0 0.0
    %256 = vmatpush1.msra.mxu0 %v163
    %257 = vmatprep.subr.mxu0 0.0
    %258 = vmatpush1.msra.mxu0 %v164
    %259 = vmatprep.subr.mxu0 0.0
    %260 = vmatpush1.msra.mxu0 %v165
    %261 = vmatprep.subr.mxu0 0.0
    %262 = vmatpush1.msra.mxu0 %v166
    %263 = vmatprep.subr.mxu0 0.0
    %264 = vmatpush1.msra.mxu0 %v167
    %265 = vmatprep.subr.mxu0 0.0
    %266 = vmatpush1.msra.mxu0 %v168
    %267 = vmatprep.subr.mxu0 0.0
    %268 = vmatpush1.msra.mxu0 %v169
    %269 = vmatprep.subr.mxu0 0.0
    %270 = vmatpush1.msra.mxu0 %v170
    %271 = vmatprep.subr.mxu0 0.0
    %272 = vmatpush1.msra.mxu0 %v171
    %273 = vmatprep.subr.mxu0 0.0
    %274 = vmatpush1.msra.mxu0 %v172
    %275 = vmatprep.subr.mxu0 0.0
    %276 = vmatpush1.msra.mxu0 %v173
    %277 = vmatprep.subr.mxu0 0.0
    %278 = vmatpush1.msra.mxu0 %v174
    %279 = vmatprep.subr.mxu0 0.0
    %280 = vmatpush1.msra.mxu0 %v175
    %281 = vmatprep.subr.mxu0 0.0
    %282 = vmatpush1.msra.mxu0 %v176
    %283 = vmatprep.subr.mxu0 0.0
    %284 = vmatpush1.msra.mxu0 %v177
    %285 = vmatprep.subr.mxu0 0.0
    %286 = vmatpush1.msra.mxu0 %v178
    %287 = vmatprep.subr.mxu0 0.0
    %288 = vmatpush1.msra.mxu0 %v179
    %289 = vmatprep.subr.mxu0 0.0
    %290 = vmatpush1.msra.mxu0 %v180
    %291 = vmatprep.subr.mxu0 0.0
    %292 = vmatpush1.msra.mxu0 %v181
    %293 = vmatprep.subr.mxu0 0.0
    %294 = vmatpush1.msra.mxu0 %v182
    %295 = vmatprep.subr.mxu0 0.0
    %296 = vmatpush1.msra.mxu0 %v183
    %297 = vmatprep.subr.mxu0 0.0
    %298 = vmatpush1.msra.mxu0 %v184
    %299 = vmatprep.subr.mxu0 0.0
    %300 = vmatpush1.msra.mxu0 %v185
    %301 = vmatprep.subr.mxu0 0.0
    %302 = vmatpush1.msra.mxu0 %v186
    %303 = vmatprep.subr.mxu0 0.0
    %304 = vmatpush1.msra.mxu0 %v187
    %305 = vmatprep.mubr.f32.mxu0 %v136
    %306 = vmatmul.mubr.f32.gmra.mrb[0].mxu0 %v135
    %v307 = vpop.f32.mrb[0].mxu0
    %v308 = vadd.f32 0.0, %v307
    %v309 = vpop.f32.mrb[0].mxu0
    %310 = vmatprep.mubr.f32.mxu0 %v141
    %311 = vmatmul.mubr.f32.gmra.mrb[0].mxu0 %v140
    %v312 = vpop.f32.mrb[0].mxu0
    %v313 = vadd.f32 0.0, %v312
    %v314 = vpop.f32.mrb[0].mxu0
    %315 = vmatprep.mubr.f32.mxu0 %v146
    %316 = vmatmul.mubr.f32.gmra.mrb[0].mxu0 %v145
    %v317 = vpop.f32.mrb[0].mxu0
    %v318 = vadd.f32 0.0, %v317
    %v319 = vpop.f32.mrb[0].mxu0
    %320 = vmatprep.mubr.f32.mxu0 %v151
    %321 = vmatmul.mubr.f32.gmra.mrb[0].mxu0 %v150
    %v322 = vpop.f32.mrb[0].mxu0
    %v323 = vadd.f32 0.0, %v322
    %v324 = vpop.f32.mrb[0].mxu0
    %325 = vdwg.mxu0
    %326 = vmatprep.subr.mxu0 0.0
    %327 = vmatpush1.msra.mxu0 %v188
    %328 = vmatprep.subr.mxu0 0.0
    %329 = vmatpush1.msra.mxu0 %v189
    %330 = vmatprep.subr.mxu0 0.0
    %331 = vmatpush1.msra.mxu0 %v190
    %332 = vmatprep.subr.mxu0 0.0
    %333 = vmatpush1.msra.mxu0 %v191
    %334 = vmatprep.subr.mxu0 0.0
    %335 = vmatpush1.msra.mxu0 %v192
    %336 = vmatprep.subr.mxu0 0.0
    %337 = vmatpush1.msra.mxu0 %v193
    %338 = vmatprep.subr.mxu0 0.0
    %339 = vmatpush1.msra.mxu0 %v194
    %340 = vmatprep.subr.mxu0 0.0
    %341 = vmatpush1.msra.mxu0 %v195
    %342 = vmatprep.subr.mxu0 0.0
    %343 = vmatpush1.msra.mxu0 %v196
    %344 = vmatprep.subr.mxu0 0.0
    %345 = vmatpush1.msra.mxu0 %v197
    %346 = vmatprep.subr.mxu0 0.0
    %347 = vmatpush1.msra.mxu0 %v198
    %348 = vmatprep.subr.mxu0 0.0
    %349 = vmatpush1.msra.mxu0 %v199
    %350 = vmatprep.subr.mxu0 0.0
    %351 = vmatpush1.msra.mxu0 %v200
    %352 = vmatprep.subr.mxu0 0.0
    %353 = vmatpush1.msra.mxu0 %v201
    %354 = vmatprep.subr.mxu0 0.0
    %355 = vmatpush1.msra.mxu0 %v202
    %356 = vmatprep.subr.mxu0 0.0
    %357 = vmatpush1.msra.mxu0 %v203
    %358 = vmatprep.subr.mxu0 0.0
    %359 = vmatpush1.msra.mxu0 %v204
    %360 = vmatprep.subr.mxu0 0.0
    %361 = vmatpush1.msra.mxu0 %v205
    %362 = vmatprep.subr.mxu0 0.0
    %363 = vmatpush1.msra.mxu0 %v206
    %364 = vmatprep.subr.mxu0 0.0
    %365 = vmatpush1.msra.mxu0 %v207
    %366 = vmatprep.subr.mxu0 0.0
    %367 = vmatpush1.msra.mxu0 %v208
    %368 = vmatprep.subr.mxu0 0.0
    %369 = vmatpush1.msra.mxu0 %v209
    %370 = vmatprep.subr.mxu0 0.0
    %371 = vmatpush1.msra.mxu0 %v210
    %372 = vmatprep.subr.mxu0 0.0
    %373 = vmatpush1.msra.mxu0 %v211
    %374 = vmatprep.subr.mxu0 0.0
    %375 = vmatpush1.msra.mxu0 %v212
    %376 = vmatprep.subr.mxu0 0.0
    %377 = vmatpush1.msra.mxu0 %v213
    %378 = vmatprep.subr.mxu0 0.0
    %379 = vmatpush1.msra.mxu0 %v214
    %380 = vmatprep.subr.mxu0 0.0
    %381 = vmatpush1.msra.mxu0 %v215
    %382 = vmatprep.subr.mxu0 0.0
    %383 = vmatpush1.msra.mxu0 %v216
    %384 = vmatprep.subr.mxu0 0.0
    %385 = vmatpush1.msra.mxu0 %v217
    %386 = vmatprep.subr.mxu0 0.0
    %387 = vmatpush1.msra.mxu0 %v218
    %388 = vmatprep.subr.mxu0 0.0
    %389 = vmatpush1.msra.mxu0 %v219
    %390 = vmatprep.mubr.f32.mxu0 %v138
    %391 = vmatmul.mubr.f32.gmra.mrb[0].mxu0 %v137
    %v392 = vpop.f32.mrb[0].mxu0
    %v393 = vadd.f32 %v308, %v392
    %v394 = vpop.f32.mrb[0].mxu0
    %395 = vmatprep.mubr.f32.mxu0 %v143
    %396 = vmatmul.mubr.f32.gmra.mrb[0].mxu0 %v142
    %v397 = vpop.f32.mrb[0].mxu0
    %v398 = vadd.f32 %v313, %v397
    %v399 = vpop.f32.mrb[0].mxu0
    %400 = vmatprep.mubr.f32.mxu0 %v148
    %401 = vmatmul.mubr.f32.gmra.mrb[0].mxu0 %v147
    %v402 = vpop.f32.mrb[0].mxu0
    %v403 = vadd.f32 %v318, %v402
    %v404 = vpop.f32.mrb[0].mxu0
    %405 = vmatprep.mubr.f32.mxu0 %v153
    %406 = vmatmul.mubr.f32.gmra.mrb[0].mxu0 %v152
    %v407 = vpop.f32.mrb[0].mxu0
    %v408 = vadd.f32 %v323, %v407
    %v409 = vpop.f32.mrb[0].mxu0
    %410 = vdwg.mxu0
    %411 = vmatprep.subr.mxu0 0.0
    %412 = vmatpush1.msra.mxu0 %v220
    %413 = vmatprep.subr.mxu0 0.0
    %414 = vmatpush1.msra.mxu0 %v221
    %415 = vmatprep.subr.mxu0 0.0
    %416 = vmatpush1.msra.mxu0 %v222
    %417 = vmatprep.subr.mxu0 0.0
    %418 = vmatpush1.msra.mxu0 %v223
    %419 = vmatprep.subr.mxu0 0.0
    %420 = vmatpush1.msra.mxu0 %v224
    %421 = vmatprep.subr.mxu0 0.0
    %422 = vmatpush1.msra.mxu0 %v225
    %423 = vmatprep.subr.mxu0 0.0
    %424 = vmatpush1.msra.mxu0 %v226
    %425 = vmatprep.subr.mxu0 0.0
    %426 = vmatpush1.msra.mxu0 %v227
    %427 = vmatprep.subr.mxu0 0.0
    %428 = vmatpush1.msra.mxu0 0.0
    %429 = vmatprep.subr.mxu0 0.0
    %430 = vmatpush1.msra.mxu0 0.0
    %431 = vmatprep.subr.mxu0 0.0
    %432 = vmatpush1.msra.mxu0 0.0
    %433 = vmatprep.subr.mxu0 0.0
    %434 = vmatpush1.msra.mxu0 0.0
    %435 = vmatprep.subr.mxu0 0.0
    %436 = vmatpush1.msra.mxu0 0.0
    %437 = vmatprep.subr.mxu0 0.0
    %438 = vmatpush1.msra.mxu0 0.0
    %439 = vmatprep.subr.mxu0 0.0
    %440 = vmatpush1.msra.mxu0 0.0
    %441 = vmatprep.subr.mxu0 0.0
    %442 = vmatpush1.msra.mxu0 0.0
    %443 = vmatprep.subr.mxu0 0.0
    %444 = vmatpush1.msra.mxu0 0.0
    %445 = vmatprep.subr.mxu0 0.0
    %446 = vmatpush1.msra.mxu0 0.0
    %447 = vmatprep.subr.mxu0 0.0
    %448 = vmatpush1.msra.mxu0 0.0
    %449 = vmatprep.subr.mxu0 0.0
    %450 = vmatpush1.msra.mxu0 0.0
    %451 = vmatprep.subr.mxu0 0.0
    %452 = vmatpush1.msra.mxu0 0.0
    %453 = vmatprep.subr.mxu0 0.0
    %454 = vmatpush1.msra.mxu0 0.0
    %455 = vmatprep.subr.mxu0 0.0
    %456 = vmatpush1.msra.mxu0 0.0
    %457 = vmatprep.subr.mxu0 0.0
    %458 = vmatpush1.msra.mxu0 0.0
    %459 = vmatprep.subr.mxu0 0.0
    %460 = vmatpush1.msra.mxu0 0.0
    %461 = vmatprep.subr.mxu0 0.0
    %462 = vmatpush1.msra.mxu0 0.0
    %463 = vmatprep.subr.mxu0 0.0
    %464 = vmatpush1.msra.mxu0 0.0
    %465 = vmatprep.subr.mxu0 0.0
    %466 = vmatpush1.msra.mxu0 0.0
    %467 = vmatprep.subr.mxu0 0.0
    %468 = vmatpush1.msra.mxu0 0.0
    %469 = vmatprep.subr.mxu0 0.0
    %470 = vmatpush1.msra.mxu0 0.0
    %471 = vmatprep.subr.mxu0 0.0
    %472 = vmatpush1.msra.mxu0 0.0
    %473 = vmatprep.subr.mxu0 0.0
    %474 = vmatpush1.msra.mxu0 0.0
    %475 = vmatprep.mubr.f32.mxu0 0.0
    %476 = vmatmul.mubr.f32.gmra.mrb[0].mxu0 %v230
    %v477 = vpop.f32.mrb[0].mxu0
    %v478 = vadd.f32 %v393, %v477
    %v479 = vpop.f32.mrb[0].mxu0
    %480 = vmatprep.mubr.f32.mxu0 0.0
    %481 = vmatmul.mubr.f32.gmra.mrb[0].mxu0 %v233
    %v482 = vpop.f32.mrb[0].mxu0
    %v483 = vadd.f32 %v398, %v482
    %v484 = vpop.f32.mrb[0].mxu0
    %485 = vmatprep.mubr.f32.mxu0 0.0
    %486 = vmatmul.mubr.f32.gmra.mrb[0].mxu0 %v236
    %v487 = vpop.f32.mrb[0].mxu0
    %v488 = vadd.f32 %v403, %v487
    %v489 = vpop.f32.mrb[0].mxu0
    %490 = vmatprep.mubr.f32.mxu0 0.0
    %491 = vmatmul.mubr.f32.gmra.mrb[0].mxu0 %v239
    %v492 = vpop.f32.mrb[0].mxu0
    %v493 = vadd.f32 %v408, %v492
    %v494 = vpop.f32.mrb[0].mxu0
    %495 = vdwg.mxu0
    %v497 = vsel %vm228, %v47, 0
    %v500 = vsel %vm228, %v52, 0
    %v503 = vsel %vm228, %v57, 0
    %v506 = vsel %vm228, %v62, 0
    %508 = vmatprep.subr.mxu0 0.0
    %509 = vmatpush1.msra.mxu0 %v63
    %510 = vmatprep.subr.mxu0 0.0
    %511 = vmatpush1.msra.mxu0 %v64
    %512 = vmatprep.subr.mxu0 0.0
    %513 = vmatpush1.msra.mxu0 %v65
    %514 = vmatprep.subr.mxu0 0.0
    %515 = vmatpush1.msra.mxu0 %v66
    %516 = vmatprep.subr.mxu0 0.0
    %517 = vmatpush1.msra.mxu0 %v67
    %518 = vmatprep.subr.mxu0 0.0
    %519 = vmatpush1.msra.mxu0 %v68
    %520 = vmatprep.subr.mxu0 0.0
    %521 = vmatpush1.msra.mxu0 %v69
    %522 = vmatprep.subr.mxu0 0.0
    %523 = vmatpush1.msra.mxu0 %v70
    %524 = vmatprep.subr.mxu0 0.0
    %525 = vmatpush1.msra.mxu0 %v71
    %526 = vmatprep.subr.mxu0 0.0
    %527 = vmatpush1.msra.mxu0 %v72
    %528 = vmatprep.subr.mxu0 0.0
    %529 = vmatpush1.msra.mxu0 %v73
    %530 = vmatprep.subr.mxu0 0.0
    %531 = vmatpush1.msra.mxu0 %v74
    %532 = vmatprep.subr.mxu0 0.0
    %533 = vmatpush1.msra.mxu0 %v75
    %534 = vmatprep.subr.mxu0 0.0
    %535 = vmatpush1.msra.mxu0 %v76
    %536 = vmatprep.subr.mxu0 0.0
    %537 = vmatpush1.msra.mxu0 %v77
    %538 = vmatprep.subr.mxu0 0.0
    %539 = vmatpush1.msra.mxu0 %v78
    %540 = vmatprep.subr.mxu0 0.0
    %541 = vmatpush1.msra.mxu0 %v79
    %542 = vmatprep.subr.mxu0 0.0
    %543 = vmatpush1.msra.mxu0 %v80
    %544 = vmatprep.subr.mxu0 0.0
    %545 = vmatpush1.msra.mxu0 %v81
    %546 = vmatprep.subr.mxu0 0.0
    %547 = vmatpush1.msra.mxu0 %v82
    %548 = vmatprep.subr.mxu0 0.0
    %549 = vmatpush1.msra.mxu0 %v83
    %550 = vmatprep.subr.mxu0 0.0
    %551 = vmatpush1.msra.mxu0 %v84
    %552 = vmatprep.subr.mxu0 0.0
    %553 = vmatpush1.msra.mxu0 %v85
    %554 = vmatprep.subr.mxu0 0.0
    %555 = vmatpush1.msra.mxu0 %v86
    %556 = vmatprep.subr.mxu0 0.0
    %557 = vmatpush1.msra.mxu0 %v87
    %558 = vmatprep.subr.mxu0 0.0
    %559 = vmatpush1.msra.mxu0 %v88
    %560 = vmatprep.subr.mxu0 0.0
    %561 = vmatpush1.msra.mxu0 %v89
    %562 = vmatprep.subr.mxu0 0.0
    %563 = vmatpush1.msra.mxu0 %v90
    %564 = vmatprep.subr.mxu0 0.0
    %565 = vmatpush1.msra.mxu0 %v91
    %566 = vmatprep.subr.mxu0 0.0
    %567 = vmatpush1.msra.mxu0 %v92
    %568 = vmatprep.subr.mxu0 0.0
    %569 = vmatpush1.msra.mxu0 %v93
    %570 = vmatprep.subr.mxu0 0.0
    %571 = vmatpush1.msra.mxu0 %v94
    %572 = vmatprep.mubr.f32.mxu0 %v44
    %573 = vmatmul.mubr.f32.gmra.mrb[0].mxu0 %v43
    %v574 = vpop.f32.mrb[0].mxu0
    %v575 = vadd.f32 %v478, %v574
    %v576 = vpop.f32.mrb[0].mxu0
    %577 = vmatprep.mubr.f32.mxu0 %v49
    %578 = vmatmul.mubr.f32.gmra.mrb[0].mxu0 %v48
    %v579 = vpop.f32.mrb[0].mxu0
    %v580 = vadd.f32 %v483, %v579
    %v581 = vpop.f32.mrb[0].mxu0
    %582 = vmatprep.mubr.f32.mxu0 %v54
    %583 = vmatmul.mubr.f32.gmra.mrb[0].mxu0 %v53
    %v584 = vpop.f32.mrb[0].mxu0
    %v585 = vadd.f32 %v488, %v584
    %v586 = vpop.f32.mrb[0].mxu0
    %587 = vmatprep.mubr.f32.mxu0 %v59
    %588 = vmatmul.mubr.f32.gmra.mrb[0].mxu0 %v58
    %v589 = vpop.f32.mrb[0].mxu0
    %v590 = vadd.f32 %v493, %v589
    %v591 = vpop.f32.mrb[0].mxu0
    %592 = vdwg.mxu0
    %593 = vmatprep.subr.mxu0 0.0
    %594 = vmatpush1.msra.mxu0 %v95
    %595 = vmatprep.subr.mxu0 0.0
    %596 = vmatpush1.msra.mxu0 %v96
    %597 = vmatprep.subr.mxu0 0.0
    %598 = vmatpush1.msra.mxu0 %v97
    %599 = vmatprep.subr.mxu0 0.0
    %600 = vmatpush1.msra.mxu0 %v98
    %601 = vmatprep.subr.mxu0 0.0
    %602 = vmatpush1.msra.mxu0 %v99
    %603 = vmatprep.subr.mxu0 0.0
    %604 = vmatpush1.msra.mxu0 %v100
    %605 = vmatprep.subr.mxu0 0.0
    %606 = vmatpush1.msra.mxu0 %v101
    %607 = vmatprep.subr.mxu0 0.0
    %608 = vmatpush1.msra.mxu0 %v102
    %609 = vmatprep.subr.mxu0 0.0
    %610 = vmatpush1.msra.mxu0 %v103
    %611 = vmatprep.subr.mxu0 0.0
    %612 = vmatpush1.msra.mxu0 %v104
    %613 = vmatprep.subr.mxu0 0.0
    %614 = vmatpush1.msra.mxu0 %v105
    %615 = vmatprep.subr.mxu0 0.0
    %616 = vmatpush1.msra.mxu0 %v106
    %617 = vmatprep.subr.mxu0 0.0
    %618 = vmatpush1.msra.mxu0 %v107
    %619 = vmatprep.subr.mxu0 0.0
    %620 = vmatpush1.msra.mxu0 %v108
    %621 = vmatprep.subr.mxu0 0.0
    %622 = vmatpush1.msra.mxu0 %v109
    %623 = vmatprep.subr.mxu0 0.0
    %624 = vmatpush1.msra.mxu0 %v110
    %625 = vmatprep.subr.mxu0 0.0
    %626 = vmatpush1.msra.mxu0 %v111
    %627 = vmatprep.subr.mxu0 0.0
    %628 = vmatpush1.msra.mxu0 %v112
    %629 = vmatprep.subr.mxu0 0.0
    %630 = vmatpush1.msra.mxu0 %v113
    %631 = vmatprep.subr.mxu0 0.0
    %632 = vmatpush1.msra.mxu0 %v114
    %633 = vmatprep.subr.mxu0 0.0
    %634 = vmatpush1.msra.mxu0 %v115
    %635 = vmatprep.subr.mxu0 0.0
    %636 = vmatpush1.msra.mxu0 %v116
    %637 = vmatprep.subr.mxu0 0.0
    %638 = vmatpush1.msra.mxu0 %v117
    %639 = vmatprep.subr.mxu0 0.0
    %640 = vmatpush1.msra.mxu0 %v118
    %641 = vmatprep.subr.mxu0 0.0
    %642 = vmatpush1.msra.mxu0 %v119
    %643 = vmatprep.subr.mxu0 0.0
    %644 = vmatpush1.msra.mxu0 %v120
    %645 = vmatprep.subr.mxu0 0.0
    %646 = vmatpush1.msra.mxu0 %v121
    %647 = vmatprep.subr.mxu0 0.0
    %648 = vmatpush1.msra.mxu0 %v122
    %649 = vmatprep.subr.mxu0 0.0
    %650 = vmatpush1.msra.mxu0 %v123
    %651 = vmatprep.subr.mxu0 0.0
    %652 = vmatpush1.msra.mxu0 %v124
    %653 = vmatprep.subr.mxu0 0.0
    %654 = vmatpush1.msra.mxu0 %v125
    %655 = vmatprep.subr.mxu0 0.0
    %656 = vmatpush1.msra.mxu0 %v126
    %657 = vmatprep.mubr.f32.mxu0 %v46
    %658 = vmatmul.mubr.f32.gmra.mrb[0].mxu0 %v45
    %v659 = vpop.f32.mrb[0].mxu0
    %v660 = vadd.f32 %v575, %v659
    %v661 = vpop.f32.mrb[0].mxu0
    %662 = vmatprep.mubr.f32.mxu0 %v51
    %663 = vmatmul.mubr.f32.gmra.mrb[0].mxu0 %v50
    %v664 = vpop.f32.mrb[0].mxu0
    %v665 = vadd.f32 %v580, %v664
    %v666 = vpop.f32.mrb[0].mxu0
    %667 = vmatprep.mubr.f32.mxu0 %v56
    %668 = vmatmul.mubr.f32.gmra.mrb[0].mxu0 %v55
    %v669 = vpop.f32.mrb[0].mxu0
    %v670 = vadd.f32 %v585, %v669
    %v671 = vpop.f32.mrb[0].mxu0
    %672 = vmatprep.mubr.f32.mxu0 %v61
    %673 = vmatmul.mubr.f32.gmra.mrb[0].mxu0 %v60
    %v674 = vpop.f32.mrb[0].mxu0
    %v675 = vadd.f32 %v590, %v674
    %v676 = vpop.f32.mrb[0].mxu0
    %677 = vdwg.mxu0
    %678 = vmatprep.subr.mxu0 0.0
    %679 = vmatpush1.msra.mxu0 %v127
    %680 = vmatprep.subr.mxu0 0.0
    %681 = vmatpush1.msra.mxu0 %v128
    %682 = vmatprep.subr.mxu0 0.0
    %683 = vmatpush1.msra.mxu0 %v129
    %684 = vmatprep.subr.mxu0 0.0
    %685 = vmatpush1.msra.mxu0 %v130
    %686 = vmatprep.subr.mxu0 0.0
    %687 = vmatpush1.msra.mxu0 %v131
    %688 = vmatprep.subr.mxu0 0.0
    %689 = vmatpush1.msra.mxu0 %v132
    %690 = vmatprep.subr.mxu0 0.0
    %691 = vmatpush1.msra.mxu0 %v133
    %692 = vmatprep.subr.mxu0 0.0
    %693 = vmatpush1.msra.mxu0 %v134
    %694 = vmatprep.subr.mxu0 0.0
    %695 = vmatpush1.msra.mxu0 0.0
    %696 = vmatprep.subr.mxu0 0.0
    %697 = vmatpush1.msra.mxu0 0.0
    %698 = vmatprep.subr.mxu0 0.0
    %699 = vmatpush1.msra.mxu0 0.0
    %700 = vmatprep.subr.mxu0 0.0
    %701 = vmatpush1.msra.mxu0 0.0
    %702 = vmatprep.subr.mxu0 0.0
    %703 = vmatpush1.msra.mxu0 0.0
    %704 = vmatprep.subr.mxu0 0.0
    %705 = vmatpush1.msra.mxu0 0.0
    %706 = vmatprep.subr.mxu0 0.0
    %707 = vmatpush1.msra.mxu0 0.0
    %708 = vmatprep.subr.mxu0 0.0
    %709 = vmatpush1.msra.mxu0 0.0
    %710 = vmatprep.subr.mxu0 0.0
    %711 = vmatpush1.msra.mxu0 0.0
    %712 = vmatprep.subr.mxu0 0.0
    %713 = vmatpush1.msra.mxu0 0.0
    %714 = vmatprep.subr.mxu0 0.0
    %715 = vmatpush1.msra.mxu0 0.0
    %716 = vmatprep.subr.mxu0 0.0
    %717 = vmatpush1.msra.mxu0 0.0
    %718 = vmatprep.subr.mxu0 0.0
    %719 = vmatpush1.msra.mxu0 0.0
    %720 = vmatprep.subr.mxu0 0.0
    %721 = vmatpush1.msra.mxu0 0.0
    %722 = vmatprep.subr.mxu0 0.0
    %723 = vmatpush1.msra.mxu0 0.0
    %724 = vmatprep.subr.mxu0 0.0
    %725 = vmatpush1.msra.mxu0 0.0
    %726 = vmatprep.subr.mxu0 0.0
    %727 = vmatpush1.msra.mxu0 0.0
    %728 = vmatprep.subr.mxu0 0.0
    %729 = vmatpush1.msra.mxu0 0.0
    %730 = vmatprep.subr.mxu0 0.0
    %731 = vmatpush1.msra.mxu0 0.0
    %732 = vmatprep.subr.mxu0 0.0
    %733 = vmatpush1.msra.mxu0 0.0
    %734 = vmatprep.subr.mxu0 0.0
    %735 = vmatpush1.msra.mxu0 0.0
    %736 = vmatprep.subr.mxu0 0.0
    %737 = vmatpush1.msra.mxu0 0.0
    %738 = vmatprep.subr.mxu0 0.0
    %739 = vmatpush1.msra.mxu0 0.0
    %740 = vmatprep.subr.mxu0 0.0
    %741 = vmatpush1.msra.mxu0 0.0
    %742 = vmatprep.mubr.f32.mxu0 0.0
    %743 = vmatmul.mubr.f32.gmra.mrb[0].mxu0 %v497
    %v744 = vpop.f32.mrb[0].mxu0
    %v745 = vadd.f32 %v660, %v744
    %v746 = vpop.f32.mrb[0].mxu0
    %747 = vmatprep.mubr.f32.mxu0 0.0
    %748 = vmatmul.mubr.f32.gmra.mrb[0].mxu0 %v500
    %v749 = vpop.f32.mrb[0].mxu0
    %v750 = vadd.f32 %v665, %v749
    %v751 = vpop.f32.mrb[0].mxu0
    %752 = vmatprep.mubr.f32.mxu0 0.0
    %753 = vmatmul.mubr.f32.gmra.mrb[0].mxu0 %v503
    %v754 = vpop.f32.mrb[0].mxu0
    %v755 = vadd.f32 %v670, %v754
    %v756 = vpop.f32.mrb[0].mxu0
    %757 = vmatprep.mubr.f32.mxu0 0.0
    %758 = vmatmul.mubr.f32.gmra.mrb[0].mxu0 %v506
    %v759 = vpop.f32.mrb[0].mxu0
    %v760 = vadd.f32 %v675, %v759
    %v761 = vpop.f32.mrb[0].mxu0
    %762 = vdwg.mxu0
    %v763 = vmul.f32 %v135, %v43
    %v764 = vmul.f32 %v136, %v44
    %v765 = vmul.f32 %v137, %v45
    %v766 = vmul.f32 %v138, %v46
    %v767 = vmul.f32 %v139, %v47
    %v768 = vmul.f32 %v140, %v48
    %v769 = vmul.f32 %v141, %v49
    %v770 = vmul.f32 %v142, %v50
    %v771 = vmul.f32 %v143, %v51
    %v772 = vmul.f32 %v144, %v52
    %v773 = vmul.f32 %v145, %v53
    %v774 = vmul.f32 %v146, %v54
    %v775 = vmul.f32 %v147, %v55
    %v776 = vmul.f32 %v148, %v56
    %v777 = vmul.f32 %v149, %v57
    %v778 = vmul.f32 %v150, %v58
    %v779 = vmul.f32 %v151, %v59
    %v780 = vmul.f32 %v152, %v60
    %v781 = vmul.f32 %v153, %v61
    %v782 = vmul.f32 %v154, %v62
    %s783 = scalar_lea.vmem [#allocation5], 1152
    %v784 = vld [vmem:[%s783] sm:$0xff]
    %v785 = vld [vmem:[%s783 + $0x8] sm:$0xff]
    %v786 = vld [vmem:[%s783 + $0x10] sm:$0xff]
    %v787 = vld [vmem:[%s783 + $0x18] sm:$0xff]
    %v788 = vld [vmem:[%s783 + $0x20] sm:$0xff]
    %v789 = vld [vmem:[%s783 + $0x28] sm:$0xff]
    %v790 = vld [vmem:[%s783 + $0x30] sm:$0xff]
    %v791 = vld [vmem:[%s783 + $0x38] sm:$0xff]
    %v792 = vld [vmem:[%s783 + $0x40] sm:$0xff]
    %v793 = vld [vmem:[%s783 + $0x48] sm:$0xff]
    %v794 = vld [vmem:[%s783 + $0x50] sm:$0xff]
    %v795 = vld [vmem:[%s783 + $0x58] sm:$0xff]
    %v796 = vld [vmem:[%s783 + $0x60] sm:$0xff]
    %v797 = vld [vmem:[%s783 + $0x68] sm:$0xff]
    %v798 = vld [vmem:[%s783 + $0x70] sm:$0xff]
    %v799 = vld [vmem:[%s783 + $0x78] sm:$0xff]
    %v800 = vld [vmem:[%s783 + $0x80] sm:$0xff]
    %v801 = vld [vmem:[%s783 + $0x88] sm:$0xff]
    %v802 = vld [vmem:[%s783 + $0x90] sm:$0xff]
    %v803 = vld [vmem:[%s783 + $0x98] sm:$0xff]
    %v804 = vld [vmem:[%s783 + $0xa0] sm:$0xff]
    %v805 = vld [vmem:[%s783 + $0xa8] sm:$0xff]
    %v806 = vld [vmem:[%s783 + $0xb0] sm:$0xff]
    %v807 = vld [vmem:[%s783 + $0xb8] sm:$0xff]
    %v808 = vld [vmem:[%s783 + $0xc0] sm:$0xff]
    %v809 = vld [vmem:[%s783 + $0xc8] sm:$0xff]
    %v810 = vld [vmem:[%s783 + $0xd0] sm:$0xff]
    %v811 = vld [vmem:[%s783 + $0xd8] sm:$0xff]
    %v812 = vld [vmem:[%s783 + $0xe0] sm:$0xff]
    %v813 = vld [vmem:[%s783 + $0xe8] sm:$0xff]
    %v814 = vld [vmem:[%s783 + $0xf0] sm:$0xff]
    %v815 = vld [vmem:[%s783 + $0xf8] sm:$0xff]
    %v816 = vld [vmem:[%s783 + $0x100] sm:$0xff]
    %v817 = vld [vmem:[%s783 + $0x108] sm:$0xff]
    %v818 = vld [vmem:[%s783 + $0x110] sm:$0xff]
    %v819 = vld [vmem:[%s783 + $0x118] sm:$0xff]
    %v820 = vld [vmem:[%s783 + $0x120] sm:$0xff]
    %v821 = vld [vmem:[%s783 + $0x128] sm:$0xff]
    %v822 = vld [vmem:[%s783 + $0x130] sm:$0xff]
    %v823 = vld [vmem:[%s783 + $0x138] sm:$0xff]
    %v824 = vld [vmem:[%s783 + $0x140] sm:$0xff]
    %v825 = vld [vmem:[%s783 + $0x148] sm:$0xff]
    %v826 = vld [vmem:[%s783 + $0x150] sm:$0xff]
    %v827 = vld [vmem:[%s783 + $0x158] sm:$0xff]
    %v828 = vld [vmem:[%s783 + $0x160] sm:$0xff]
    %v829 = vld [vmem:[%s783 + $0x168] sm:$0xff]
    %v830 = vld [vmem:[%s783 + $0x170] sm:$0xff]
    %v831 = vld [vmem:[%s783 + $0x178] sm:$0xff]
    %v832 = vld [vmem:[%s783 + $0x180] sm:$0xff]
    %v833 = vld [vmem:[%s783 + $0x188] sm:$0xff]
    %v834 = vld [vmem:[%s783 + $0x190] sm:$0xff]
    %v835 = vld [vmem:[%s783 + $0x198] sm:$0xff]
    %v836 = vld [vmem:[%s783 + $0x1a0] sm:$0xff]
    %v837 = vld [vmem:[%s783 + $0x1a8] sm:$0xff]
    %v838 = vld [vmem:[%s783 + $0x1b0] sm:$0xff]
    %v839 = vld [vmem:[%s783 + $0x1b8] sm:$0xff]
    %v840 = vld [vmem:[%s783 + $0x1c0] sm:$0xff]
    %v841 = vld [vmem:[%s783 + $0x1c8] sm:$0xff]
    %v842 = vld [vmem:[%s783 + $0x1d0] sm:$0xff]
    %v843 = vld [vmem:[%s783 + $0x1d8] sm:$0xff]
    %v844 = vld [vmem:[%s783 + $0x1e0] sm:$0xff]
    %v845 = vld [vmem:[%s783 + $0x1e8] sm:$0xff]
    %v846 = vld [vmem:[%s783 + $0x1f0] sm:$0xff]
    %v847 = vld [vmem:[%s783 + $0x1f8] sm:$0xff]
    %v848 = vld [vmem:[%s783 + $0x200] sm:$0xff]
    %v849 = vld [vmem:[%s783 + $0x208] sm:$0xff]
    %v850 = vld [vmem:[%s783 + $0x210] sm:$0xff]
    %v851 = vld [vmem:[%s783 + $0x218] sm:$0xff]
    %v852 = vld [vmem:[%s783 + $0x220] sm:$0xff]
    %v853 = vld [vmem:[%s783 + $0x228] sm:$0xff]
    %v854 = vld [vmem:[%s783 + $0x230] sm:$0xff]
    %v855 = vld [vmem:[%s783 + $0x238] sm:$0xff]
    %v857 = vsel %vm228, %v767, 0
    %v860 = vsel %vm228, %v772, 0
    %v863 = vsel %vm228, %v777, 0
    %v866 = vsel %vm228, %v782, 0
    %868 = vmatprep.subr.mxu0 0.0
    %869 = vmatpush1.msra.mxu0 %v784
    %870 = vmatprep.subr.mxu0 0.0
    %871 = vmatpush1.msra.mxu0 %v785
    %872 = vmatprep.subr.mxu0 0.0
    %873 = vmatpush1.msra.mxu0 %v786
    %874 = vmatprep.subr.mxu0 0.0
    %875 = vmatpush1.msra.mxu0 %v787
    %876 = vmatprep.subr.mxu0 0.0
    %877 = vmatpush1.msra.mxu0 %v788
    %878 = vmatprep.subr.mxu0 0.0
    %879 = vmatpush1.msra.mxu0 %v789
    %880 = vmatprep.subr.mxu0 0.0
    %881 = vmatpush1.msra.mxu0 %v790
    %882 = vmatprep.subr.mxu0 0.0
    %883 = vmatpush1.msra.mxu0 %v791
    %884 = vmatprep.subr.mxu0 0.0
    %885 = vmatpush1.msra.mxu0 %v792
    %886 = vmatprep.subr.mxu0 0.0
    %887 = vmatpush1.msra.mxu0 %v793
    %888 = vmatprep.subr.mxu0 0.0
    %889 = vmatpush1.msra.mxu0 %v794
    %890 = vmatprep.subr.mxu0 0.0
    %891 = vmatpush1.msra.mxu0 %v795
    %892 = vmatprep.subr.mxu0 0.0
    %893 = vmatpush1.msra.mxu0 %v796
    %894 = vmatprep.subr.mxu0 0.0
    %895 = vmatpush1.msra.mxu0 %v797
    %896 = vmatprep.subr.mxu0 0.0
    %897 = vmatpush1.msra.mxu0 %v798
    %898 = vmatprep.subr.mxu0 0.0
    %899 = vmatpush1.msra.mxu0 %v799
    %900 = vmatprep.subr.mxu0 0.0
    %901 = vmatpush1.msra.mxu0 %v800
    %902 = vmatprep.subr.mxu0 0.0
    %903 = vmatpush1.msra.mxu0 %v801
    %904 = vmatprep.subr.mxu0 0.0
    %905 = vmatpush1.msra.mxu0 %v802
    %906 = vmatprep.subr.mxu0 0.0
    %907 = vmatpush1.msra.mxu0 %v803
    %908 = vmatprep.subr.mxu0 0.0
    %909 = vmatpush1.msra.mxu0 %v804
    %910 = vmatprep.subr.mxu0 0.0
    %911 = vmatpush1.msra.mxu0 %v805
    %912 = vmatprep.subr.mxu0 0.0
    %913 = vmatpush1.msra.mxu0 %v806
    %914 = vmatprep.subr.mxu0 0.0
    %915 = vmatpush1.msra.mxu0 %v807
    %916 = vmatprep.subr.mxu0 0.0
    %917 = vmatpush1.msra.mxu0 %v808
    %918 = vmatprep.subr.mxu0 0.0
    %919 = vmatpush1.msra.mxu0 %v809
    %920 = vmatprep.subr.mxu0 0.0
    %921 = vmatpush1.msra.mxu0 %v810
    %922 = vmatprep.subr.mxu0 0.0
    %923 = vmatpush1.msra.mxu0 %v811
    %924 = vmatprep.subr.mxu0 0.0
    %925 = vmatpush1.msra.mxu0 %v812
    %926 = vmatprep.subr.mxu0 0.0
    %927 = vmatpush1.msra.mxu0 %v813
    %928 = vmatprep.subr.mxu0 0.0
    %929 = vmatpush1.msra.mxu0 %v814
    %930 = vmatprep.subr.mxu0 0.0
    %931 = vmatpush1.msra.mxu0 %v815
    %932 = vmatprep.mubr.f32.mxu0 %v764
    %933 = vmatmul.mubr.f32.gmra.mrb[0].mxu0 %v763
    %v934 = vpop.f32.mrb[0].mxu0
    %v935 = vadd.f32 0.0, %v934
    %v936 = vpop.f32.mrb[0].mxu0
    %937 = vmatprep.mubr.f32.mxu0 %v769
    %938 = vmatmul.mubr.f32.gmra.mrb[0].mxu0 %v768
    %v939 = vpop.f32.mrb[0].mxu0
    %v940 = vadd.f32 0.0, %v939
    %v941 = vpop.f32.mrb[0].mxu0
    %942 = vmatprep.mubr.f32.mxu0 %v774
    %943 = vmatmul.mubr.f32.gmra.mrb[0].mxu0 %v773
    %v944 = vpop.f32.mrb[0].mxu0
    %v945 = vadd.f32 0.0, %v944
    %v946 = vpop.f32.mrb[0].mxu0
    %947 = vmatprep.mubr.f32.mxu0 %v779
    %948 = vmatmul.mubr.f32.gmra.mrb[0].mxu0 %v778
    %v949 = vpop.f32.mrb[0].mxu0
    %v950 = vadd.f32 0.0, %v949
    %v951 = vpop.f32.mrb[0].mxu0
    %952 = vdwg.mxu0
    %953 = vmatprep.subr.mxu0 0.0
    %954 = vmatpush1.msra.mxu0 %v816
    %955 = vmatprep.subr.mxu0 0.0
    %956 = vmatpush1.msra.mxu0 %v817
    %957 = vmatprep.subr.mxu0 0.0
    %958 = vmatpush1.msra.mxu0 %v818
    %959 = vmatprep.subr.mxu0 0.0
    %960 = vmatpush1.msra.mxu0 %v819
    %961 = vmatprep.subr.mxu0 0.0
    %962 = vmatpush1.msra.mxu0 %v820
    %963 = vmatprep.subr.mxu0 0.0
    %964 = vmatpush1.msra.mxu0 %v821
    %965 = vmatprep.subr.mxu0 0.0
    %966 = vmatpush1.msra.mxu0 %v822
    %967 = vmatprep.subr.mxu0 0.0
    %968 = vmatpush1.msra.mxu0 %v823
    %969 = vmatprep.subr.mxu0 0.0
    %970 = vmatpush1.msra.mxu0 %v824
    %971 = vmatprep.subr.mxu0 0.0
    %972 = vmatpush1.msra.mxu0 %v825
    %973 = vmatprep.subr.mxu0 0.0
    %974 = vmatpush1.msra.mxu0 %v826
    %975 = vmatprep.subr.mxu0 0.0
    %976 = vmatpush1.msra.mxu0 %v827
    %977 = vmatprep.subr.mxu0 0.0
    %978 = vmatpush1.msra.mxu0 %v828
    %979 = vmatprep.subr.mxu0 0.0
    %980 = vmatpush1.msra.mxu0 %v829
    %981 = vmatprep.subr.mxu0 0.0
    %982 = vmatpush1.msra.mxu0 %v830
    %983 = vmatprep.subr.mxu0 0.0
    %984 = vmatpush1.msra.mxu0 %v831
    %985 = vmatprep.subr.mxu0 0.0
    %986 = vmatpush1.msra.mxu0 %v832
    %987 = vmatprep.subr.mxu0 0.0
    %988 = vmatpush1.msra.mxu0 %v833
    %989 = vmatprep.subr.mxu0 0.0
    %990 = vmatpush1.msra.mxu0 %v834
    %991 = vmatprep.subr.mxu0 0.0
    %992 = vmatpush1.msra.mxu0 %v835
    %993 = vmatprep.subr.mxu0 0.0
    %994 = vmatpush1.msra.mxu0 %v836
    %995 = vmatprep.subr.mxu0 0.0
    %996 = vmatpush1.msra.mxu0 %v837
    %997 = vmatprep.subr.mxu0 0.0
    %998 = vmatpush1.msra.mxu0 %v838
    %999 = vmatprep.subr.mxu0 0.0
    %1000 = vmatpush1.msra.mxu0 %v839
    %1001 = vmatprep.subr.mxu0 0.0
    %1002 = vmatpush1.msra.mxu0 %v840
    %1003 = vmatprep.subr.mxu0 0.0
    %1004 = vmatpush1.msra.mxu0 %v841
    %1005 = vmatprep.subr.mxu0 0.0
    %1006 = vmatpush1.msra.mxu0 %v842
    %1007 = vmatprep.subr.mxu0 0.0
    %1008 = vmatpush1.msra.mxu0 %v843
    %1009 = vmatprep.subr.mxu0 0.0
    %1010 = vmatpush1.msra.mxu0 %v844
    %1011 = vmatprep.subr.mxu0 0.0
    %1012 = vmatpush1.msra.mxu0 %v845
    %1013 = vmatprep.subr.mxu0 0.0
    %1014 = vmatpush1.msra.mxu0 %v846
    %1015 = vmatprep.subr.mxu0 0.0
    %1016 = vmatpush1.msra.mxu0 %v847
    %1017 = vmatprep.mubr.f32.mxu0 %v766
    %1018 = vmatmul.mubr.f32.gmra.mrb[0].mxu0 %v765
    %v1019 = vpop.f32.mrb[0].mxu0
    %v1020 = vadd.f32 %v935, %v1019
    %v1021 = vpop.f32.mrb[0].mxu0
    %1022 = vmatprep.mubr.f32.mxu0 %v771
    %1023 = vmatmul.mubr.f32.gmra.mrb[0].mxu0 %v770
    %v1024 = vpop.f32.mrb[0].mxu0
    %v1025 = vadd.f32 %v940, %v1024
    %v1026 = vpop.f32.mrb[0].mxu0
    %1027 = vmatprep.mubr.f32.mxu0 %v776
    %1028 = vmatmul.mubr.f32.gmra.mrb[0].mxu0 %v775
    %v1029 = vpop.f32.mrb[0].mxu0
    %v1030 = vadd.f32 %v945, %v1029
    %v1031 = vpop.f32.mrb[0].mxu0
    %1032 = vmatprep.mubr.f32.mxu0 %v781
    %1033 = vmatmul.mubr.f32.gmra.mrb[0].mxu0 %v780
    %v1034 = vpop.f32.mrb[0].mxu0
    %v1035 = vadd.f32 %v950, %v1034
    %v1036 = vpop.f32.mrb[0].mxu0
    %1037 = vdwg.mxu0
    %1038 = vmatprep.subr.mxu0 0.0
    %1039 = vmatpush1.msra.mxu0 %v848
    %1040 = vmatprep.subr.mxu0 0.0
    %1041 = vmatpush1.msra.mxu0 %v849
    %1042 = vmatprep.subr.mxu0 0.0
    %1043 = vmatpush1.msra.mxu0 %v850
    %1044 = vmatprep.subr.mxu0 0.0
    %1045 = vmatpush1.msra.mxu0 %v851
    %1046 = vmatprep.subr.mxu0 0.0
    %1047 = vmatpush1.msra.mxu0 %v852
    %1048 = vmatprep.subr.mxu0 0.0
    %1049 = vmatpush1.msra.mxu0 %v853
    %1050 = vmatprep.subr.mxu0 0.0
    %1051 = vmatpush1.msra.mxu0 %v854
    %1052 = vmatprep.subr.mxu0 0.0
    %1053 = vmatpush1.msra.mxu0 %v855
    %1054 = vmatprep.subr.mxu0 0.0
    %1055 = vmatpush1.msra.mxu0 0.0
    %1056 = vmatprep.subr.mxu0 0.0
    %1057 = vmatpush1.msra.mxu0 0.0
    %1058 = vmatprep.subr.mxu0 0.0
    %1059 = vmatpush1.msra.mxu0 0.0
    %1060 = vmatprep.subr.mxu0 0.0
    %1061 = vmatpush1.msra.mxu0 0.0
    %1062 = vmatprep.subr.mxu0 0.0
    %1063 = vmatpush1.msra.mxu0 0.0
    %1064 = vmatprep.subr.mxu0 0.0
    %1065 = vmatpush1.msra.mxu0 0.0
    %1066 = vmatprep.subr.mxu0 0.0
    %1067 = vmatpush1.msra.mxu0 0.0
    %1068 = vmatprep.subr.mxu0 0.0
    %1069 = vmatpush1.msra.mxu0 0.0
    %1070 = vmatprep.subr.mxu0 0.0
    %1071 = vmatpush1.msra.mxu0 0.0
    %1072 = vmatprep.subr.mxu0 0.0
    %1073 = vmatpush1.msra.mxu0 0.0
    %1074 = vmatprep.subr.mxu0 0.0
    %1075 = vmatpush1.msra.mxu0 0.0
    %1076 = vmatprep.subr.mxu0 0.0
    %1077 = vmatpush1.msra.mxu0 0.0
    %1078 = vmatprep.subr.mxu0 0.0
    %1079 = vmatpush1.msra.mxu0 0.0
    %1080 = vmatprep.subr.mxu0 0.0
    %1081 = vmatpush1.msra.mxu0 0.0
    %1082 = vmatprep.subr.mxu0 0.0
    %1083 = vmatpush1.msra.mxu0 0.0
    %1084 = vmatprep.subr.mxu0 0.0
    %1085 = vmatpush1.msra.mxu0 0.0
    %1086 = vmatprep.subr.mxu0 0.0
    %1087 = vmatpush1.msra.mxu0 0.0
    %1088 = vmatprep.subr.mxu0 0.0
    %1089 = vmatpush1.msra.mxu0 0.0
    %1090 = vmatprep.subr.mxu0 0.0
    %1091 = vmatpush1.msra.mxu0 0.0
    %1092 = vmatprep.subr.mxu0 0.0
    %1093 = vmatpush1.msra.mxu0 0.0
    %1094 = vmatprep.subr.mxu0 0.0
    %1095 = vmatpush1.msra.mxu0 0.0
    %1096 = vmatprep.subr.mxu0 0.0
    %1097 = vmatpush1.msra.mxu0 0.0
    %1098 = vmatprep.subr.mxu0 0.0
    %1099 = vmatpush1.msra.mxu0 0.0
    %1100 = vmatprep.subr.mxu0 0.0
    %1101 = vmatpush1.msra.mxu0 0.0
    %1102 = vmatprep.mubr.f32.mxu0 0.0
    %1103 = vmatmul.mubr.f32.gmra.mrb[0].mxu0 %v857
    %v1104 = vpop.f32.mrb[0].mxu0
    %v1105 = vadd.f32 %v1020, %v1104
    %v1106 = vpop.f32.mrb[0].mxu0
    %1107 = vmatprep.mubr.f32.mxu0 0.0
    %1108 = vmatmul.mubr.f32.gmra.mrb[0].mxu0 %v860
    %v1109 = vpop.f32.mrb[0].mxu0
    %v1110 = vadd.f32 %v1025, %v1109
    %v1111 = vpop.f32.mrb[0].mxu0
    %1112 = vmatprep.mubr.f32.mxu0 0.0
    %1113 = vmatmul.mubr.f32.gmra.mrb[0].mxu0 %v863
    %v1114 = vpop.f32.mrb[0].mxu0
    %v1115 = vadd.f32 %v1030, %v1114
    %v1116 = vpop.f32.mrb[0].mxu0
    %1117 = vmatprep.mubr.f32.mxu0 0.0
    %1118 = vmatmul.mubr.f32.gmra.mrb[0].mxu0 %v866
    %v1119 = vpop.f32.mrb[0].mxu0
    %v1120 = vadd.f32 %v1035, %v1119
    %v1121 = vpop.f32.mrb[0].mxu0
    %1122 = vdwg.mxu0
    %v1123 = vadd.f32 %v745, %v1105
    %v1124 = vadd.f32 %v750, %v1110
    %v1125 = vadd.f32 %v755, %v1115
    %v1126 = vadd.f32 %v760, %v1120
    %v1127 = vld [vmem:[%s2] sm:$0x1]
    %v1129 = vlaneseq
    %v1130 = vshrl.u32 %v1129, 7
    %v1131 = vsub.s32 0, %v1130
    %v1132 = vrot.slane %v1127, %v1131
    %v1134 = vadd.f32 %v1123, %v1132
    %v1135 = vadd.f32 %v1124, %v1132
    %v1136 = vadd.f32 %v1125, %v1132
    %v1137 = vadd.f32 %v1126, %v1132
    %1138 = vst [vmem:[#allocation7] sm:$0xff] %v1134
    %1139 = vst [vmem:[#allocation7 + $0x8] sm:$0xff] %v1135
    %1140 = vst [vmem:[#allocation7 + $0x10] sm:$0xff] %v1136
    %1141 = vst [vmem:[#allocation7 + $0x18] sm:$0xff] %v1137
    // Predicated region
    $region22: #{tpu_custom_call.1} parent=1 // pred_check
      _
    $region23: #{tpu_custom_call.1} parent=1 // pred_check_branch
      %1143 = sbr.rel (0) target = $region25
    $region24: #{tpu_custom_call.1} parent=1 // pred_region
      %s1145 = ssub.s32 512, 512
      %1146 = vsyncadd [#allocation4], %s1145
      %s1147 = sshll.u32 [#allocation7], 4
      %s1148 = int_to_ptr.vmem [resolvable:$true] %s1147
      %1153 = dma.vmem_to_hbm [thread:$0]  %s1148, 512, %s3, [#allocation4], 128, 128, 8
    $region25: #{tpu_custom_call.1} parent=1 // pred_fallthru
      _
    // Predicated region
    $region26: #{tpu_custom_call.1} parent=1 // pred_check
      _
    $region27: #{tpu_custom_call.1} parent=1 // pred_check_branch
      %1155 = sbr.rel (0) target = $region29
    $region28: #{tpu_custom_call.1} parent=1 // pred_region
      %1156 = dma.done [#allocation4], 512
    $region29: #{tpu_custom_call.1} parent=1 // pred_fallthru
      _
    %1157 = vsyncpa [#allocation3], 1
    %1158 = vsyncpa [#allocation6], 1
    %1159 = vsyncpa [#allocation4], 1

// kernel: tpu_custom_call.1
$region0: #{tpu_custom_call.1}
  #allocation0 [shape = 'u32[]', space=smem, size = 0x4, offset = 0x4, fixed_abs, tag = 'smem constant byte address 0x4 - core index']
  #allocation1 [shape = 'u32[144,128]{1,0:T(1,128)}', space=vmem, size = 0x12000, scoped, tag = 'internal scratch']
  %s0 = inlined_call_operand.hbm [shape: f32[32,576], index: 0, kind: input, shape index: {}]
  %s1 = inlined_call_operand.hbm [shape: f32[3,576,128], index: 1, kind: input, shape index: {}]
  %s2 = inlined_call_operand.vmem [shape: f32[1,128], index: 2, kind: input, shape index: {}]
  %s3 = inlined_call_operand.hbm [shape: f32[32,128], index: 3, kind: output, shape index: {}]
  %s4 = sld [smem:[#allocation0]]
  $region30: #{tpu_custom_call.1} parent=0
    _
  %s6 = ssub.s32 1, %s4
  %s7 = scalar_select 0, %s6, %s4
  $region1: #{tpu_custom_call.1} parent=0
    #allocation2 [shape = 'u8[81920]{0}', space=vmem, size = 0x14000, scoped, tag = 'input window, operand 0, single buffered']
    #allocation3 [shape = 's32[1]{0}', space=sflag, size = 0x4, scoped, tag = 'scoped memory for tpu_custom_call.1']
    #allocation4 [shape = 's32[1]{0}', space=sflag, size = 0x4, scoped, tag = 'scoped memory for tpu_custom_call.1']
    #allocation5 [shape = 'u8[884736]{0}', space=vmem, size = 0xd8000, scoped, tag = 'input window, operand 1, single buffered']
    #allocation6 [shape = 's32[1]{0}', space=sflag, size = 0x4, scoped, tag = 'scoped memory for tpu_custom_call.1']
    #allocation7 [shape = 'u8[16384]{0}', space=vmem, size = 0x4000, scoped, tag = 'output window, operand 0, single buffered']
    %8 = vsyncpa [#allocation3], 0
    %9 = vsyncpa [#allocation6], 0
    %10 = vsyncpa [#allocation4], 0
    // Predicated region
    $region2: #{tpu_custom_call.1} parent=1 // pred_check
      _
    $region3: #{tpu_custom_call.1} parent=1 // pred_check_branch
      %12 = sbr.rel (0) target = $region5
    $region4: #{tpu_custom_call.1} parent=1 // pred_region
      %s14 = ssub.s32 2560, 2560
      %15 = vsyncadd [#allocation3], %s14
      %s16 = sshll.u32 [#allocation2], 4
      %s17 = int_to_ptr.vmem [resolvable:$true] %s16
      %22 = dma.hbm_to_vmem [thread:$0]  %s0, 2560, %s17, [#allocation3], 640, 640, 40
    $region5: #{tpu_custom_call.1} parent=1 // pred_fallthru
      _
    // Predicated region
    $region6: #{tpu_custom_call.1} parent=1 // pred_check
      _
    $region7: #{tpu_custom_call.1} parent=1 // pred_check_branch
      %24 = sbr.rel (0) target = $region9
    $region8: #{tpu_custom_call.1} parent=1 // pred_region
      %s26 = ssub.s32 27648, 27648
      %27 = vsyncadd [#allocation6], %s26
      %s28 = sshll.u32 [#allocation5], 4
      %s29 = int_to_ptr.vmem [resolvable:$true] %s28
      %34 = dma.hbm_to_vmem [thread:$0]  %s1, 27648, %s29, [#allocation6], 128, 128, 8
    $region9: #{tpu_custom_call.1} parent=1 // pred_fallthru
      _
    // Predicated region
    $region10: #{tpu_custom_call.1} parent=1 // pred_check
      _
    $region11: #{tpu_custom_call.1} parent=1 // pred_check_branch
      %36 = sbr.rel (0) target = $region13
    $region12: #{tpu_custom_call.1} parent=1 // pred_region
      _
    $region13: #{tpu_custom_call.1} parent=1 // pred_fallthru
      _
    // Predicated region
    $region14: #{tpu_custom_call.1} parent=1 // pred_check
      _
    $region15: #{tpu_custom_call.1} parent=1 // pred_check_branch
      %38 = sbr.rel (0) target = $region17
    $region16: #{tpu_custom_call.1} parent=1 // pred_region
      %39 = dma.done [#allocation3], 2560
    $region17: #{tpu_custom_call.1} parent=1 // pred_fallthru
      _
    // Predicated region
    $region18: #{tpu_custom_call.1} parent=1 // pred_check
      _
    $region19: #{tpu_custom_call.1} parent=1 // pred_check_branch
      %41 = sbr.rel (0) target = $region21
    $region20: #{tpu_custom_call.1} parent=1 // pred_region
      %42 = dma.done [#allocation6], 27648
    $region21: #{tpu_custom_call.1} parent=1 // pred_fallthru
      _
    %v43 = vld [vmem:[#allocation2] sm:$0xff]
    %v44 = vld [vmem:[#allocation2 + $0x8] sm:$0xff]
    %v45 = vld [vmem:[#allocation2 + $0x10] sm:$0xff]
    %v46 = vld [vmem:[#allocation2 + $0x18] sm:$0xff]
    %v47 = vld [vmem:[#allocation2 + $0x20] sm:$0xff]
    %v48 = vld [vmem:[#allocation2 + $0x28] sm:$0xff]
    %v49 = vld [vmem:[#allocation2 + $0x30] sm:$0xff]
    %v50 = vld [vmem:[#allocation2 + $0x38] sm:$0xff]
    %v51 = vld [vmem:[#allocation2 + $0x40] sm:$0xff]
    %v52 = vld [vmem:[#allocation2 + $0x48] sm:$0xff]
    %v53 = vld [vmem:[#allocation2 + $0x50] sm:$0xff]
    %v54 = vld [vmem:[#allocation2 + $0x58] sm:$0xff]
    %v55 = vld [vmem:[#allocation2 + $0x60] sm:$0xff]
    %v56 = vld [vmem:[#allocation2 + $0x68] sm:$0xff]
    %v57 = vld [vmem:[#allocation2 + $0x70] sm:$0xff]
    %v58 = vld [vmem:[#allocation2 + $0x78] sm:$0xff]
    %v59 = vld [vmem:[#allocation2 + $0x80] sm:$0xff]
    %v60 = vld [vmem:[#allocation2 + $0x88] sm:$0xff]
    %v61 = vld [vmem:[#allocation2 + $0x90] sm:$0xff]
    %v62 = vld [vmem:[#allocation2 + $0x98] sm:$0xff]
    %v63 = vld [vmem:[#allocation5] sm:$0xff]
    %v64 = vld [vmem:[#allocation5 + $0x8] sm:$0xff]
    %v65 = vld [vmem:[#allocation5 + $0x10] sm:$0xff]
    %v66 = vld [vmem:[#allocation5 + $0x18] sm:$0xff]
    %v67 = vld [vmem:[#allocation5 + $0x20] sm:$0xff]
    %v68 = vld [vmem:[#allocation5 + $0x28] sm:$0xff]
    %v69 = vld [vmem:[#allocation5 + $0x30] sm:$0xff]
    %v70 = vld [vmem:[#allocation5 + $0x38] sm:$0xff]
    %v71 = vld [vmem:[#allocation5 + $0x40] sm:$0xff]
    %v72 = vld [vmem:[#allocation5 + $0x48] sm:$0xff]
    %v73 = vld [vmem:[#allocation5 + $0x50] sm:$0xff]
    %v74 = vld [vmem:[#allocation5 + $0x58] sm:$0xff]
    %v75 = vld [vmem:[#allocation5 + $0x60] sm:$0xff]
    %v76 = vld [vmem:[#allocation5 + $0x68] sm:$0xff]
    %v77 = vld [vmem:[#allocation5 + $0x70] sm:$0xff]
    %v78 = vld [vmem:[#allocation5 + $0x78] sm:$0xff]
    %v79 = vld [vmem:[#allocation5 + $0x80] sm:$0xff]
    %v80 = vld [vmem:[#allocation5 + $0x88] sm:$0xff]
    %v81 = vld [vmem:[#allocation5 + $0x90] sm:$0xff]
    %v82 = vld [vmem:[#allocation5 + $0x98] sm:$0xff]
    %v83 = vld [vmem:[#allocation5 + $0xa0] sm:$0xff]
    %v84 = vld [vmem:[#allocation5 + $0xa8] sm:$0xff]
    %v85 = vld [vmem:[#allocation5 + $0xb0] sm:$0xff]
    %v86 = vld [vmem:[#allocation5 + $0xb8] sm:$0xff]
    %v87 = vld [vmem:[#allocation5 + $0xc0] sm:$0xff]
    %v88 = vld [vmem:[#allocation5 + $0xc8] sm:$0xff]
    %v89 = vld [vmem:[#allocation5 + $0xd0] sm:$0xff]
    %v90 = vld [vmem:[#allocation5 + $0xd8] sm:$0xff]
    %v91 = vld [vmem:[#allocation5 + $0xe0] sm:$0xff]
    %v92 = vld [vmem:[#allocation5 + $0xe8] sm:$0xff]
    %v93 = vld [vmem:[#allocation5 + $0xf0] sm:$0xff]
    %v94 = vld [vmem:[#allocation5 + $0xf8] sm:$0xff]
    %v95 = vld [vmem:[#allocation5 + $0x100] sm:$0xff]
    %v96 = vld [vmem:[#allocation5 + $0x108] sm:$0xff]
    %v97 = vld [vmem:[#allocation5 + $0x110] sm:$0xff]
    %v98 = vld [vmem:[#allocation5 + $0x118] sm:$0xff]
    %v99 = vld [vmem:[#allocation5 + $0x120] sm:$0xff]
    %v100 = vld [vmem:[#allocation5 + $0x128] sm:$0xff]
    %v101 = vld [vmem:[#allocation5 + $0x130] sm:$0xff]
    %v102 = vld [vmem:[#allocation5 + $0x138] sm:$0xff]
    %v103 = vld [vmem:[#allocation5 + $0x140] sm:$0xff]
    %v104 = vld [vmem:[#allocation5 + $0x148] sm:$0xff]
    %v105 = vld [vmem:[#allocation5 + $0x150] sm:$0xff]
    %v106 = vld [vmem:[#allocation5 + $0x158] sm:$0xff]
    %v107 = vld [vmem:[#allocation5 + $0x160] sm:$0xff]
    %v108 = vld [vmem:[#allocation5 + $0x168] sm:$0xff]
    %v109 = vld [vmem:[#allocation5 + $0x170] sm:$0xff]
    %v110 = vld [vmem:[#allocation5 + $0x178] sm:$0xff]
    %v111 = vld [vmem:[#allocation5 + $0x180] sm:$0xff]
    %v112 = vld [vmem:[#allocation5 + $0x188] sm:$0xff]
    %v113 = vld [vmem:[#allocation5 + $0x190] sm:$0xff]
    %v114 = vld [vmem:[#allocation5 + $0x198] sm:$0xff]
    %v115 = vld [vmem:[#allocation5 + $0x1a0] sm:$0xff]
    %v116 = vld [vmem:[#allocation5 + $0x1a8] sm:$0xff]
    %v117 = vld [vmem:[#allocation5 + $0x1b0] sm:$0xff]
    %v118 = vld [vmem:[#allocation5 + $0x1b8] sm:$0xff]
    %v119 = vld [vmem:[#allocation5 + $0x1c0] sm:$0xff]
    %v120 = vld [vmem:[#allocation5 + $0x1c8] sm:$0xff]
    %v121 = vld [vmem:[#allocation5 + $0x1d0] sm:$0xff]
    %v122 = vld [vmem:[#allocation5 + $0x1d8] sm:$0xff]
    %v123 = vld [vmem:[#allocation5 + $0x1e0] sm:$0xff]
    %v124 = vld [vmem:[#allocation5 + $0x1e8] sm:$0xff]
    %v125 = vld [vmem:[#allocation5 + $0x1f0] sm:$0xff]
    %v126 = vld [vmem:[#allocation5 + $0x1f8] sm:$0xff]
    %v127 = vld [vmem:[#allocation5 + $0x200] sm:$0xff]
    %v128 = vld [vmem:[#allocation5 + $0x208] sm:$0xff]
    %v129 = vld [vmem:[#allocation5 + $0x210] sm:$0xff]
    %v130 = vld [vmem:[#allocation5 + $0x218] sm:$0xff]
    %v131 = vld [vmem:[#allocation5 + $0x220] sm:$0xff]
    %v132 = vld [vmem:[#allocation5 + $0x228] sm:$0xff]
    %v133 = vld [vmem:[#allocation5 + $0x230] sm:$0xff]
    %v134 = vld [vmem:[#allocation5 + $0x238] sm:$0xff]
    %v135 = vmul.f32 %v43, %v43
    %v136 = vmul.f32 %v44, %v44
    %v137 = vmul.f32 %v45, %v45
    %v138 = vmul.f32 %v46, %v46
    %v139 = vmul.f32 %v47, %v47
    %v140 = vmul.f32 %v48, %v48
    %v141 = vmul.f32 %v49, %v49
    %v142 = vmul.f32 %v50, %v50
    %v143 = vmul.f32 %v51, %v51
    %v144 = vmul.f32 %v52, %v52
    %v145 = vmul.f32 %v53, %v53
    %v146 = vmul.f32 %v54, %v54
    %v147 = vmul.f32 %v55, %v55
    %v148 = vmul.f32 %v56, %v56
    %v149 = vmul.f32 %v57, %v57
    %v150 = vmul.f32 %v58, %v58
    %v151 = vmul.f32 %v59, %v59
    %v152 = vmul.f32 %v60, %v60
    %v153 = vmul.f32 %v61, %v61
    %v154 = vmul.f32 %v62, %v62
    %s155 = scalar_lea.vmem [#allocation5], 576
    %v156 = vld [vmem:[%s155] sm:$0xff]
    %v157 = vld [vmem:[%s155 + $0x8] sm:$0xff]
    %v158 = vld [vmem:[%s155 + $0x10] sm:$0xff]
    %v159 = vld [vmem:[%s155 + $0x18] sm:$0xff]
    %v160 = vld [vmem:[%s155 + $0x20] sm:$0xff]
    %v161 = vld [vmem:[%s155 + $0x28] sm:$0xff]
    %v162 = vld [vmem:[%s155 + $0x30] sm:$0xff]
    %v163 = vld [vmem:[%s155 + $0x38] sm:$0xff]
    %v164 = vld [vmem:[%s155 + $0x40] sm:$0xff]
    %v165 = vld [vmem:[%s155 + $0x48] sm:$0xff]
    %v166 = vld [vmem:[%s155 + $0x50] sm:$0xff]
    %v167 = vld [vmem:[%s155 + $0x58] sm:$0xff]
    %v168 = vld [vmem:[%s155 + $0x60] sm:$0xff]
    %v169 = vld [vmem:[%s155 + $0x68] sm:$0xff]
    %v170 = vld [vmem:[%s155 + $0x70] sm:$0xff]
    %v171 = vld [vmem:[%s155 + $0x78] sm:$0xff]
    %v172 = vld [vmem:[%s155 + $0x80] sm:$0xff]
    %v173 = vld [vmem:[%s155 + $0x88] sm:$0xff]
    %v174 = vld [vmem:[%s155 + $0x90] sm:$0xff]
    %v175 = vld [vmem:[%s155 + $0x98] sm:$0xff]
    %v176 = vld [vmem:[%s155 + $0xa0] sm:$0xff]
    %v177 = vld [vmem:[%s155 + $0xa8] sm:$0xff]
    %v178 = vld [vmem:[%s155 + $0xb0] sm:$0xff]
    %v179 = vld [vmem:[%s155 + $0xb8] sm:$0xff]
    %v180 = vld [vmem:[%s155 + $0xc0] sm:$0xff]
    %v181 = vld [vmem:[%s155 + $0xc8] sm:$0xff]
    %v182 = vld [vmem:[%s155 + $0xd0] sm:$0xff]
    %v183 = vld [vmem:[%s155 + $0xd8] sm:$0xff]
    %v184 = vld [vmem:[%s155 + $0xe0] sm:$0xff]
    %v185 = vld [vmem:[%s155 + $0xe8] sm:$0xff]
    %v186 = vld [vmem:[%s155 + $0xf0] sm:$0xff]
    %v187 = vld [vmem:[%s155 + $0xf8] sm:$0xff]
    %v188 = vld [vmem:[%s155 + $0x100] sm:$0xff]
    %v189 = vld [vmem:[%s155 + $0x108] sm:$0xff]
    %v190 = vld [vmem:[%s155 + $0x110] sm:$0xff]
    %v191 = vld [vmem:[%s155 + $0x118] sm:$0xff]
    %v192 = vld [vmem:[%s155 + $0x120] sm:$0xff]
    %v193 = vld [vmem:[%s155 + $0x128] sm:$0xff]
    %v194 = vld [vmem:[%s155 + $0x130] sm:$0xff]
    %v195 = vld [vmem:[%s155 + $0x138] sm:$0xff]
    %v196 = vld [vmem:[%s155 + $0x140] sm:$0xff]
    %v197 = vld [vmem:[%s155 + $0x148] sm:$0xff]
    %v198 = vld [vmem:[%s155 + $0x150] sm:$0xff]
    %v199 = vld [vmem:[%s155 + $0x158] sm:$0xff]
    %v200 = vld [vmem:[%s155 + $0x160] sm:$0xff]
    %v201 = vld [vmem:[%s155 + $0x168] sm:$0xff]
    %v202 = vld [vmem:[%s155 + $0x170] sm:$0xff]
    %v203 = vld [vmem:[%s155 + $0x178] sm:$0xff]
    %v204 = vld [vmem:[%s155 + $0x180] sm:$0xff]
    %v205 = vld [vmem:[%s155 + $0x188] sm:$0xff]
    %v206 = vld [vmem:[%s155 + $0x190] sm:$0xff]
    %v207 = vld [vmem:[%s155 + $0x198] sm:$0xff]
    %v208 = vld [vmem:[%s155 + $0x1a0] sm:$0xff]
    %v209 = vld [vmem:[%s155 + $0x1a8] sm:$0xff]
    %v210 = vld [vmem:[%s155 + $0x1b0] sm:$0xff]
    %v211 = vld [vmem:[%s155 + $0x1b8] sm:$0xff]
    %v212 = vld [vmem:[%s155 + $0x1c0] sm:$0xff]
    %v213 = vld [vmem:[%s155 + $0x1c8] sm:$0xff]
    %v214 = vld [vmem:[%s155 + $0x1d0] sm:$0xff]
    %v215 = vld [vmem:[%s155 + $0x1d8] sm:$0xff]
    %v216 = vld [vmem:[%s155 + $0x1e0] sm:$0xff]
    %v217 = vld [vmem:[%s155 + $0x1e8] sm:$0xff]
    %v218 = vld [vmem:[%s155 + $0x1f0] sm:$0xff]
    %v219 = vld [vmem:[%s155 + $0x1f8] sm:$0xff]
    %v220 = vld [vmem:[%s155 + $0x200] sm:$0xff]
    %v221 = vld [vmem:[%s155 + $0x208] sm:$0xff]
    %v222 = vld [vmem:[%s155 + $0x210] sm:$0xff]
    %v223 = vld [vmem:[%s155 + $0x218] sm:$0xff]
    %v224 = vld [vmem:[%s155 + $0x220] sm:$0xff]
    %v225 = vld [vmem:[%s155 + $0x228] sm:$0xff]
    %v226 = vld [vmem:[%s155 + $0x230] sm:$0xff]
    %v227 = vld [vmem:[%s155 + $0x238] sm:$0xff]
    %vm228 = vcmask 523264
    %v230 = vsel %vm228, %v139, 0
    %v233 = vsel %vm228, %v144, 0
    %v236 = vsel %vm228, %v149, 0
    %v239 = vsel %vm228, %v154, 0
    %241 = vmatprep.subr.mxu0 0.0
    %242 = vmatpush1.msra.mxu0 %v156
    %243 = vmatprep.subr.mxu0 0.0
    %244 = vmatpush1.msra.mxu0 %v157
    %245 = vmatprep.subr.mxu0 0.0
    %246 = vmatpush1.msra.mxu0 %v158
    %247 = vmatprep.subr.mxu0 0.0
    %248 = vmatpush1.msra.mxu0 %v159
    %249 = vmatprep.subr.mxu0 0.0
    %250 = vmatpush1.msra.mxu0 %v160
    %251 = vmatprep.subr.mxu0 0.0
    %252 = vmatpush1.msra.mxu0 %v161
    %253 = vmatprep.subr.mxu0 0.0
    %254 = vmatpush1.msra.mxu0 %v162
    %255 = vmatprep.subr.mxu0 0.0
    %256 = vmatpush1.msra.mxu0 %v163
    %257 = vmatprep.subr.mxu0 0.0
    %258 = vmatpush1.msra.mxu0 %v164
    %259 = vmatprep.subr.mxu0 0.0
    %260 = vmatpush1.msra.mxu0 %v165
    %261 = vmatprep.subr.mxu0 0.0
    %262 = vmatpush1.msra.mxu0 %v166
    %263 = vmatprep.subr.mxu0 0.0
    %264 = vmatpush1.msra.mxu0 %v167
    %265 = vmatprep.subr.mxu0 0.0
    %266 = vmatpush1.msra.mxu0 %v168
    %267 = vmatprep.subr.mxu0 0.0
    %268 = vmatpush1.msra.mxu0 %v169
    %269 = vmatprep.subr.mxu0 0.0
    %270 = vmatpush1.msra.mxu0 %v170
    %271 = vmatprep.subr.mxu0 0.0
    %272 = vmatpush1.msra.mxu0 %v171
    %273 = vmatprep.subr.mxu0 0.0
    %274 = vmatpush1.msra.mxu0 %v172
    %275 = vmatprep.subr.mxu0 0.0
    %276 = vmatpush1.msra.mxu0 %v173
    %277 = vmatprep.subr.mxu0 0.0
    %278 = vmatpush1.msra.mxu0 %v174
    %279 = vmatprep.subr.mxu0 0.0
    %280 = vmatpush1.msra.mxu0 %v175
    %281 = vmatprep.subr.mxu0 0.0
    %282 = vmatpush1.msra.mxu0 %v176
    %283 = vmatprep.subr.mxu0 0.0
    %284 = vmatpush1.msra.mxu0 %v177
    %285 = vmatprep.subr.mxu0 0.0
    %286 = vmatpush1.msra.mxu0 %v178
    %287 = vmatprep.subr.mxu0 0.0
    %288 = vmatpush1.msra.mxu0 %v179
    %289 = vmatprep.subr.mxu0 0.0
    %290 = vmatpush1.msra.mxu0 %v180
    %291 = vmatprep.subr.mxu0 0.0
    %292 = vmatpush1.msra.mxu0 %v181
    %293 = vmatprep.subr.mxu0 0.0
    %294 = vmatpush1.msra.mxu0 %v182
    %295 = vmatprep.subr.mxu0 0.0
    %296 = vmatpush1.msra.mxu0 %v183
    %297 = vmatprep.subr.mxu0 0.0
    %298 = vmatpush1.msra.mxu0 %v184
    %299 = vmatprep.subr.mxu0 0.0
    %300 = vmatpush1.msra.mxu0 %v185
    %301 = vmatprep.subr.mxu0 0.0
    %302 = vmatpush1.msra.mxu0 %v186
    %303 = vmatprep.subr.mxu0 0.0
    %304 = vmatpush1.msra.mxu0 %v187
    %305 = vmatprep.mubr.f32.mxu0 %v136
    %306 = vmatmul.mubr.f32.gmra.mrb[0].mxu0 %v135
    %v307 = vpop.f32.mrb[0].mxu0
    %v308 = vadd.f32 0.0, %v307
    %v309 = vpop.f32.mrb[0].mxu0
    %310 = vmatprep.mubr.f32.mxu0 %v141
    %311 = vmatmul.mubr.f32.gmra.mrb[0].mxu0 %v140
    %v312 = vpop.f32.mrb[0].mxu0
    %v313 = vadd.f32 0.0, %v312
    %v314 = vpop.f32.mrb[0].mxu0
    %315 = vmatprep.mubr.f32.mxu0 %v146
    %316 = vmatmul.mubr.f32.gmra.mrb[0].mxu0 %v145
    %v317 = vpop.f32.mrb[0].mxu0
    %v318 = vadd.f32 0.0, %v317
    %v319 = vpop.f32.mrb[0].mxu0
    %320 = vmatprep.mubr.f32.mxu0 %v151
    %321 = vmatmul.mubr.f32.gmra.mrb[0].mxu0 %v150
    %v322 = vpop.f32.mrb[0].mxu0
    %v323 = vadd.f32 0.0, %v322
    %v324 = vpop.f32.mrb[0].mxu0
    %325 = vdwg.mxu0
    %326 = vmatprep.subr.mxu0 0.0
    %327 = vmatpush1.msra.mxu0 %v188
    %328 = vmatprep.subr.mxu0 0.0
    %329 = vmatpush1.msra.mxu0 %v189
    %330 = vmatprep.subr.mxu0 0.0
    %331 = vmatpush1.msra.mxu0 %v190
    %332 = vmatprep.subr.mxu0 0.0
    %333 = vmatpush1.msra.mxu0 %v191
    %334 = vmatprep.subr.mxu0 0.0
    %335 = vmatpush1.msra.mxu0 %v192
    %336 = vmatprep.subr.mxu0 0.0
    %337 = vmatpush1.msra.mxu0 %v193
    %338 = vmatprep.subr.mxu0 0.0
    %339 = vmatpush1.msra.mxu0 %v194
    %340 = vmatprep.subr.mxu0 0.0
    %341 = vmatpush1.msra.mxu0 %v195
    %342 = vmatprep.subr.mxu0 0.0
    %343 = vmatpush1.msra.mxu0 %v196
    %344 = vmatprep.subr.mxu0 0.0
    %345 = vmatpush1.msra.mxu0 %v197
    %346 = vmatprep.subr.mxu0 0.0
    %347 = vmatpush1.msra.mxu0 %v198
    %348 = vmatprep.subr.mxu0 0.0
    %349 = vmatpush1.msra.mxu0 %v199
    %350 = vmatprep.subr.mxu0 0.0
    %351 = vmatpush1.msra.mxu0 %v200
    %352 = vmatprep.subr.mxu0 0.0
    %353 = vmatpush1.msra.mxu0 %v201
    %354 = vmatprep.subr.mxu0 0.0
    %355 = vmatpush1.msra.mxu0 %v202
    %356 = vmatprep.subr.mxu0 0.0
    %357 = vmatpush1.msra.mxu0 %v203
    %358 = vmatprep.subr.mxu0 0.0
    %359 = vmatpush1.msra.mxu0 %v204
    %360 = vmatprep.subr.mxu0 0.0
    %361 = vmatpush1.msra.mxu0 %v205
    %362 = vmatprep.subr.mxu0 0.0
    %363 = vmatpush1.msra.mxu0 %v206
    %364 = vmatprep.subr.mxu0 0.0
    %365 = vmatpush1.msra.mxu0 %v207
    %366 = vmatprep.subr.mxu0 0.0
    %367 = vmatpush1.msra.mxu0 %v208
    %368 = vmatprep.subr.mxu0 0.0
    %369 = vmatpush1.msra.mxu0 %v209
    %370 = vmatprep.subr.mxu0 0.0
    %371 = vmatpush1.msra.mxu0 %v210
    %372 = vmatprep.subr.mxu0 0.0
    %373 = vmatpush1.msra.mxu0 %v211
    %374 = vmatprep.subr.mxu0 0.0
    %375 = vmatpush1.msra.mxu0 %v212
    %376 = vmatprep.subr.mxu0 0.0
    %377 = vmatpush1.msra.mxu0 %v213
    %378 = vmatprep.subr.mxu0 0.0
    %379 = vmatpush1.msra.mxu0 %v214
    %380 = vmatprep.subr.mxu0 0.0
    %381 = vmatpush1.msra.mxu0 %v215
    %382 = vmatprep.subr.mxu0 0.0
    %383 = vmatpush1.msra.mxu0 %v216
    %384 = vmatprep.subr.mxu0 0.0
    %385 = vmatpush1.msra.mxu0 %v217
    %386 = vmatprep.subr.mxu0 0.0
    %387 = vmatpush1.msra.mxu0 %v218
    %388 = vmatprep.subr.mxu0 0.0
    %389 = vmatpush1.msra.mxu0 %v219
    %390 = vmatprep.mubr.f32.mxu0 %v138
    %391 = vmatmul.mubr.f32.gmra.mrb[0].mxu0 %v137
    %v392 = vpop.f32.mrb[0].mxu0
    %v393 = vadd.f32 %v308, %v392
    %v394 = vpop.f32.mrb[0].mxu0
    %395 = vmatprep.mubr.f32.mxu0 %v143
    %396 = vmatmul.mubr.f32.gmra.mrb[0].mxu0 %v142
    %v397 = vpop.f32.mrb[0].mxu0
    %v398 = vadd.f32 %v313, %v397
    %v399 = vpop.f32.mrb[0].mxu0
    %400 = vmatprep.mubr.f32.mxu0 %v148
    %401 = vmatmul.mubr.f32.gmra.mrb[0].mxu0 %v147
    %v402 = vpop.f32.mrb[0].mxu0
    %v403 = vadd.f32 %v318, %v402
    %v404 = vpop.f32.mrb[0].mxu0
    %405 = vmatprep.mubr.f32.mxu0 %v153
    %406 = vmatmul.mubr.f32.gmra.mrb[0].mxu0 %v152
    %v407 = vpop.f32.mrb[0].mxu0
    %v408 = vadd.f32 %v323, %v407
    %v409 = vpop.f32.mrb[0].mxu0
    %410 = vdwg.mxu0
    %411 = vmatprep.subr.mxu0 0.0
    %412 = vmatpush1.msra.mxu0 %v220
    %413 = vmatprep.subr.mxu0 0.0
    %414 = vmatpush1.msra.mxu0 %v221
    %415 = vmatprep.subr.mxu0 0.0
    %416 = vmatpush1.msra.mxu0 %v222
    %417 = vmatprep.subr.mxu0 0.0
    %418 = vmatpush1.msra.mxu0 %v223
    %419 = vmatprep.subr.mxu0 0.0
    %420 = vmatpush1.msra.mxu0 %v224
    %421 = vmatprep.subr.mxu0 0.0
    %422 = vmatpush1.msra.mxu0 %v225
    %423 = vmatprep.subr.mxu0 0.0
    %424 = vmatpush1.msra.mxu0 %v226
    %425 = vmatprep.subr.mxu0 0.0
    %426 = vmatpush1.msra.mxu0 %v227
    %427 = vmatprep.subr.mxu0 0.0
    %428 = vmatpush1.msra.mxu0 0.0
    %429 = vmatprep.subr.mxu0 0.0
    %430 = vmatpush1.msra.mxu0 0.0
    %431 = vmatprep.subr.mxu0 0.0
    %432 = vmatpush1.msra.mxu0 0.0
    %433 = vmatprep.subr.mxu0 0.0
    %434 = vmatpush1.msra.mxu0 0.0
    %435 = vmatprep.subr.mxu0 0.0
    %436 = vmatpush1.msra.mxu0 0.0
    %437 = vmatprep.subr.mxu0 0.0
    %438 = vmatpush1.msra.mxu0 0.0
    %439 = vmatprep.subr.mxu0 0.0
    %440 = vmatpush1.msra.mxu0 0.0
    %441 = vmatprep.subr.mxu0 0.0
    %442 = vmatpush1.msra.mxu0 0.0
    %443 = vmatprep.subr.mxu0 0.0
    %444 = vmatpush1.msra.mxu0 0.0
    %445 = vmatprep.subr.mxu0 0.0
    %446 = vmatpush1.msra.mxu0 0.0
    %447 = vmatprep.subr.mxu0 0.0
    %448 = vmatpush1.msra.mxu0 0.0
    %449 = vmatprep.subr.mxu0 0.0
    %450 = vmatpush1.msra.mxu0 0.0
    %451 = vmatprep.subr.mxu0 0.0
    %452 = vmatpush1.msra.mxu0 0.0
    %453 = vmatprep.subr.mxu0 0.0
    %454 = vmatpush1.msra.mxu0 0.0
    %455 = vmatprep.subr.mxu0 0.0
    %456 = vmatpush1.msra.mxu0 0.0
    %457 = vmatprep.subr.mxu0 0.0
    %458 = vmatpush1.msra.mxu0 0.0
    %459 = vmatprep.subr.mxu0 0.0
    %460 = vmatpush1.msra.mxu0 0.0
    %461 = vmatprep.subr.mxu0 0.0
    %462 = vmatpush1.msra.mxu0 0.0
    %463 = vmatprep.subr.mxu0 0.0
    %464 = vmatpush1.msra.mxu0 0.0
    %465 = vmatprep.subr.mxu0 0.0
    %466 = vmatpush1.msra.mxu0 0.0
    %467 = vmatprep.subr.mxu0 0.0
    %468 = vmatpush1.msra.mxu0 0.0
    %469 = vmatprep.subr.mxu0 0.0
    %470 = vmatpush1.msra.mxu0 0.0
    %471 = vmatprep.subr.mxu0 0.0
    %472 = vmatpush1.msra.mxu0 0.0
    %473 = vmatprep.subr.mxu0 0.0
    %474 = vmatpush1.msra.mxu0 0.0
    %475 = vmatprep.mubr.f32.mxu0 0.0
    %476 = vmatmul.mubr.f32.gmra.mrb[0].mxu0 %v230
    %v477 = vpop.f32.mrb[0].mxu0
    %v478 = vadd.f32 %v393, %v477
    %v479 = vpop.f32.mrb[0].mxu0
    %480 = vmatprep.mubr.f32.mxu0 0.0
    %481 = vmatmul.mubr.f32.gmra.mrb[0].mxu0 %v233
    %v482 = vpop.f32.mrb[0].mxu0
    %v483 = vadd.f32 %v398, %v482
    %v484 = vpop.f32.mrb[0].mxu0
    %485 = vmatprep.mubr.f32.mxu0 0.0
    %486 = vmatmul.mubr.f32.gmra.mrb[0].mxu0 %v236
    %v487 = vpop.f32.mrb[0].mxu0
    %v488 = vadd.f32 %v403, %v487
    %v489 = vpop.f32.mrb[0].mxu0
    %490 = vmatprep.mubr.f32.mxu0 0.0
    %491 = vmatmul.mubr.f32.gmra.mrb[0].mxu0 %v239
    %v492 = vpop.f32.mrb[0].mxu0
    %v493 = vadd.f32 %v408, %v492
    %v494 = vpop.f32.mrb[0].mxu0
    %495 = vdwg.mxu0
    %v497 = vsel %vm228, %v47, 0
    %v500 = vsel %vm228, %v52, 0
    %v503 = vsel %vm228, %v57, 0
    %v506 = vsel %vm228, %v62, 0
    %508 = vmatprep.subr.mxu0 0.0
    %509 = vmatpush1.msra.mxu0 %v63
    %510 = vmatprep.subr.mxu0 0.0
    %511 = vmatpush1.msra.mxu0 %v64
    %512 = vmatprep.subr.mxu0 0.0
    %513 = vmatpush1.msra.mxu0 %v65
    %514 = vmatprep.subr.mxu0 0.0
    %515 = vmatpush1.msra.mxu0 %v66
    %516 = vmatprep.subr.mxu0 0.0
    %517 = vmatpush1.msra.mxu0 %v67
    %518 = vmatprep.subr.mxu0 0.0
    %519 = vmatpush1.msra.mxu0 %v68
    %520 = vmatprep.subr.mxu0 0.0
    %521 = vmatpush1.msra.mxu0 %v69
    %522 = vmatprep.subr.mxu0 0.0
    %523 = vmatpush1.msra.mxu0 %v70
    %524 = vmatprep.subr.mxu0 0.0
    %525 = vmatpush1.msra.mxu0 %v71
    %526 = vmatprep.subr.mxu0 0.0
    %527 = vmatpush1.msra.mxu0 %v72
    %528 = vmatprep.subr.mxu0 0.0
    %529 = vmatpush1.msra.mxu0 %v73
    %530 = vmatprep.subr.mxu0 0.0
    %531 = vmatpush1.msra.mxu0 %v74
    %532 = vmatprep.subr.mxu0 0.0
    %533 = vmatpush1.msra.mxu0 %v75
    %534 = vmatprep.subr.mxu0 0.0
    %535 = vmatpush1.msra.mxu0 %v76
    %536 = vmatprep.subr.mxu0 0.0
    %537 = vmatpush1.msra.mxu0 %v77
    %538 = vmatprep.subr.mxu0 0.0
    %539 = vmatpush1.msra.mxu0 %v78
    %540 = vmatprep.subr.mxu0 0.0
    %541 = vmatpush1.msra.mxu0 %v79
    %542 = vmatprep.subr.mxu0 0.0
    %543 = vmatpush1.msra.mxu0 %v80
    %544 = vmatprep.subr.mxu0 0.0
    %545 = vmatpush1.msra.mxu0 %v81
    %546 = vmatprep.subr.mxu0 0.0
    %547 = vmatpush1.msra.mxu0 %v82
    %548 = vmatprep.subr.mxu0 0.0
    %549 = vmatpush1.msra.mxu0 %v83
    %550 = vmatprep.subr.mxu0 0.0
    %551 = vmatpush1.msra.mxu0 %v84
    %552 = vmatprep.subr.mxu0 0.0
    %553 = vmatpush1.msra.mxu0 %v85
    %554 = vmatprep.subr.mxu0 0.0
    %555 = vmatpush1.msra.mxu0 %v86
    %556 = vmatprep.subr.mxu0 0.0
    %557 = vmatpush1.msra.mxu0 %v87
    %558 = vmatprep.subr.mxu0 0.0
    %559 = vmatpush1.msra.mxu0 %v88
    %560 = vmatprep.subr.mxu0 0.0
    %561 = vmatpush1.msra.mxu0 %v89
    %562 = vmatprep.subr.mxu0 0.0
    %563 = vmatpush1.msra.mxu0 %v90
    %564 = vmatprep.subr.mxu0 0.0
    %565 = vmatpush1.msra.mxu0 %v91
    %566 = vmatprep.subr.mxu0 0.0
    %567 = vmatpush1.msra.mxu0 %v92
    %568 = vmatprep.subr.mxu0 0.0
    %569 = vmatpush1.msra.mxu0 %v93
    %570 = vmatprep.subr.mxu0 0.0
    %571 = vmatpush1.msra.mxu0 %v94
    %572 = vmatprep.mubr.f32.mxu0 %v44
    %573 = vmatmul.mubr.f32.gmra.mrb[0].mxu0 %v43
    %v574 = vpop.f32.mrb[0].mxu0
    %v575 = vadd.f32 %v478, %v574
    %v576 = vpop.f32.mrb[0].mxu0
    %577 = vmatprep.mubr.f32.mxu0 %v49
    %578 = vmatmul.mubr.f32.gmra.mrb[0].mxu0 %v48
    %v579 = vpop.f32.mrb[0].mxu0
    %v580 = vadd.f32 %v483, %v579
    %v581 = vpop.f32.mrb[0].mxu0
    %582 = vmatprep.mubr.f32.mxu0 %v54
    %583 = vmatmul.mubr.f32.gmra.mrb[0].mxu0 %v53
    %v584 = vpop.f32.mrb[0].mxu0
    %v585 = vadd.f32 %v488, %v584
    %v586 = vpop.f32.mrb[0].mxu0
    %587 = vmatprep.mubr.f32.mxu0 %v59
    %588 = vmatmul.mubr.f32.gmra.mrb[0].mxu0 %v58
    %v589 = vpop.f32.mrb[0].mxu0
    %v590 = vadd.f32 %v493, %v589
    %v591 = vpop.f32.mrb[0].mxu0
    %592 = vdwg.mxu0
    %593 = vmatprep.subr.mxu0 0.0
    %594 = vmatpush1.msra.mxu0 %v95
    %595 = vmatprep.subr.mxu0 0.0
    %596 = vmatpush1.msra.mxu0 %v96
    %597 = vmatprep.subr.mxu0 0.0
    %598 = vmatpush1.msra.mxu0 %v97
    %599 = vmatprep.subr.mxu0 0.0
    %600 = vmatpush1.msra.mxu0 %v98
    %601 = vmatprep.subr.mxu0 0.0
    %602 = vmatpush1.msra.mxu0 %v99
    %603 = vmatprep.subr.mxu0 0.0
    %604 = vmatpush1.msra.mxu0 %v100
    %605 = vmatprep.subr.mxu0 0.0
    %606 = vmatpush1.msra.mxu0 %v101
    %607 = vmatprep.subr.mxu0 0.0
    %608 = vmatpush1.msra.mxu0 %v102
    %609 = vmatprep.subr.mxu0 0.0
    %610 = vmatpush1.msra.mxu0 %v103
    %611 = vmatprep.subr.mxu0 0.0
    %612 = vmatpush1.msra.mxu0 %v104
    %613 = vmatprep.subr.mxu0 0.0
    %614 = vmatpush1.msra.mxu0 %v105
    %615 = vmatprep.subr.mxu0 0.0
    %616 = vmatpush1.msra.mxu0 %v106
    %617 = vmatprep.subr.mxu0 0.0
    %618 = vmatpush1.msra.mxu0 %v107
    %619 = vmatprep.subr.mxu0 0.0
    %620 = vmatpush1.msra.mxu0 %v108
    %621 = vmatprep.subr.mxu0 0.0
    %622 = vmatpush1.msra.mxu0 %v109
    %623 = vmatprep.subr.mxu0 0.0
    %624 = vmatpush1.msra.mxu0 %v110
    %625 = vmatprep.subr.mxu0 0.0
    %626 = vmatpush1.msra.mxu0 %v111
    %627 = vmatprep.subr.mxu0 0.0
    %628 = vmatpush1.msra.mxu0 %v112
    %629 = vmatprep.subr.mxu0 0.0
    %630 = vmatpush1.msra.mxu0 %v113
    %631 = vmatprep.subr.mxu0 0.0
    %632 = vmatpush1.msra.mxu0 %v114
    %633 = vmatprep.subr.mxu0 0.0
    %634 = vmatpush1.msra.mxu0 %v115
    %635 = vmatprep.subr.mxu0 0.0
    %636 = vmatpush1.msra.mxu0 %v116
    %637 = vmatprep.subr.mxu0 0.0
    %638 = vmatpush1.msra.mxu0 %v117
    %639 = vmatprep.subr.mxu0 0.0
    %640 = vmatpush1.msra.mxu0 %v118
    %641 = vmatprep.subr.mxu0 0.0
    %642 = vmatpush1.msra.mxu0 %v119
    %643 = vmatprep.subr.mxu0 0.0
    %644 = vmatpush1.msra.mxu0 %v120
    %645 = vmatprep.subr.mxu0 0.0
    %646 = vmatpush1.msra.mxu0 %v121
    %647 = vmatprep.subr.mxu0 0.0
    %648 = vmatpush1.msra.mxu0 %v122
    %649 = vmatprep.subr.mxu0 0.0
    %650 = vmatpush1.msra.mxu0 %v123
    %651 = vmatprep.subr.mxu0 0.0
    %652 = vmatpush1.msra.mxu0 %v124
    %653 = vmatprep.subr.mxu0 0.0
    %654 = vmatpush1.msra.mxu0 %v125
    %655 = vmatprep.subr.mxu0 0.0
    %656 = vmatpush1.msra.mxu0 %v126
    %657 = vmatprep.mubr.f32.mxu0 %v46
    %658 = vmatmul.mubr.f32.gmra.mrb[0].mxu0 %v45
    %v659 = vpop.f32.mrb[0].mxu0
    %v660 = vadd.f32 %v575, %v659
    %v661 = vpop.f32.mrb[0].mxu0
    %662 = vmatprep.mubr.f32.mxu0 %v51
    %663 = vmatmul.mubr.f32.gmra.mrb[0].mxu0 %v50
    %v664 = vpop.f32.mrb[0].mxu0
    %v665 = vadd.f32 %v580, %v664
    %v666 = vpop.f32.mrb[0].mxu0
    %667 = vmatprep.mubr.f32.mxu0 %v56
    %668 = vmatmul.mubr.f32.gmra.mrb[0].mxu0 %v55
    %v669 = vpop.f32.mrb[0].mxu0
    %v670 = vadd.f32 %v585, %v669
    %v671 = vpop.f32.mrb[0].mxu0
    %672 = vmatprep.mubr.f32.mxu0 %v61
    %673 = vmatmul.mubr.f32.gmra.mrb[0].mxu0 %v60
    %v674 = vpop.f32.mrb[0].mxu0
    %v675 = vadd.f32 %v590, %v674
    %v676 = vpop.f32.mrb[0].mxu0
    %677 = vdwg.mxu0
    %678 = vmatprep.subr.mxu0 0.0
    %679 = vmatpush1.msra.mxu0 %v127
    %680 = vmatprep.subr.mxu0 0.0
    %681 = vmatpush1.msra.mxu0 %v128
    %682 = vmatprep.subr.mxu0 0.0
    %683 = vmatpush1.msra.mxu0 %v129
    %684 = vmatprep.subr.mxu0 0.0
    %685 = vmatpush1.msra.mxu0 %v130
    %686 = vmatprep.subr.mxu0 0.0
    %687 = vmatpush1.msra.mxu0 %v131
    %688 = vmatprep.subr.mxu0 0.0
    %689 = vmatpush1.msra.mxu0 %v132
    %690 = vmatprep.subr.mxu0 0.0
    %691 = vmatpush1.msra.mxu0 %v133
    %692 = vmatprep.subr.mxu0 0.0
    %693 = vmatpush1.msra.mxu0 %v134
    %694 = vmatprep.subr.mxu0 0.0
    %695 = vmatpush1.msra.mxu0 0.0
    %696 = vmatprep.subr.mxu0 0.0
    %697 = vmatpush1.msra.mxu0 0.0
    %698 = vmatprep.subr.mxu0 0.0
    %699 = vmatpush1.msra.mxu0 0.0
    %700 = vmatprep.subr.mxu0 0.0
    %701 = vmatpush1.msra.mxu0 0.0
    %702 = vmatprep.subr.mxu0 0.0
    %703 = vmatpush1.msra.mxu0 0.0
    %704 = vmatprep.subr.mxu0 0.0
    %705 = vmatpush1.msra.mxu0 0.0
    %706 = vmatprep.subr.mxu0 0.0
    %707 = vmatpush1.msra.mxu0 0.0
    %708 = vmatprep.subr.mxu0 0.0
    %709 = vmatpush1.msra.mxu0 0.0
    %710 = vmatprep.subr.mxu0 0.0
    %711 = vmatpush1.msra.mxu0 0.0
    %712 = vmatprep.subr.mxu0 0.0
    %713 = vmatpush1.msra.mxu0 0.0
    %714 = vmatprep.subr.mxu0 0.0
    %715 = vmatpush1.msra.mxu0 0.0
    %716 = vmatprep.subr.mxu0 0.0
    %717 = vmatpush1.msra.mxu0 0.0
    %718 = vmatprep.subr.mxu0 0.0
    %719 = vmatpush1.msra.mxu0 0.0
    %720 = vmatprep.subr.mxu0 0.0
    %721 = vmatpush1.msra.mxu0 0.0
    %722 = vmatprep.subr.mxu0 0.0
    %723 = vmatpush1.msra.mxu0 0.0
    %724 = vmatprep.subr.mxu0 0.0
    %725 = vmatpush1.msra.mxu0 0.0
    %726 = vmatprep.subr.mxu0 0.0
    %727 = vmatpush1.msra.mxu0 0.0
    %728 = vmatprep.subr.mxu0 0.0
    %729 = vmatpush1.msra.mxu0 0.0
    %730 = vmatprep.subr.mxu0 0.0
    %731 = vmatpush1.msra.mxu0 0.0
    %732 = vmatprep.subr.mxu0 0.0
    %733 = vmatpush1.msra.mxu0 0.0
    %734 = vmatprep.subr.mxu0 0.0
    %735 = vmatpush1.msra.mxu0 0.0
    %736 = vmatprep.subr.mxu0 0.0
    %737 = vmatpush1.msra.mxu0 0.0
    %738 = vmatprep.subr.mxu0 0.0
    %739 = vmatpush1.msra.mxu0 0.0
    %740 = vmatprep.subr.mxu0 0.0
    %741 = vmatpush1.msra.mxu0 0.0
    %742 = vmatprep.mubr.f32.mxu0 0.0
    %743 = vmatmul.mubr.f32.gmra.mrb[0].mxu0 %v497
    %v744 = vpop.f32.mrb[0].mxu0
    %v745 = vadd.f32 %v660, %v744
    %v746 = vpop.f32.mrb[0].mxu0
    %747 = vmatprep.mubr.f32.mxu0 0.0
    %748 = vmatmul.mubr.f32.gmra.mrb[0].mxu0 %v500
    %v749 = vpop.f32.mrb[0].mxu0
    %v750 = vadd.f32 %v665, %v749
    %v751 = vpop.f32.mrb[0].mxu0
    %752 = vmatprep.mubr.f32.mxu0 0.0
    %753 = vmatmul.mubr.f32.gmra.mrb[0].mxu0 %v503
    %v754 = vpop.f32.mrb[0].mxu0
    %v755 = vadd.f32 %v670, %v754
    %v756 = vpop.f32.mrb[0].mxu0
    %757 = vmatprep.mubr.f32.mxu0 0.0
    %758 = vmatmul.mubr.f32.gmra.mrb[0].mxu0 %v506
    %v759 = vpop.f32.mrb[0].mxu0
    %v760 = vadd.f32 %v675, %v759
    %v761 = vpop.f32.mrb[0].mxu0
    %762 = vdwg.mxu0
    %v763 = vmul.f32 %v135, %v43
    %v764 = vmul.f32 %v136, %v44
    %v765 = vmul.f32 %v137, %v45
    %v766 = vmul.f32 %v138, %v46
    %v767 = vmul.f32 %v139, %v47
    %v768 = vmul.f32 %v140, %v48
    %v769 = vmul.f32 %v141, %v49
    %v770 = vmul.f32 %v142, %v50
    %v771 = vmul.f32 %v143, %v51
    %v772 = vmul.f32 %v144, %v52
    %v773 = vmul.f32 %v145, %v53
    %v774 = vmul.f32 %v146, %v54
    %v775 = vmul.f32 %v147, %v55
    %v776 = vmul.f32 %v148, %v56
    %v777 = vmul.f32 %v149, %v57
    %v778 = vmul.f32 %v150, %v58
    %v779 = vmul.f32 %v151, %v59
    %v780 = vmul.f32 %v152, %v60
    %v781 = vmul.f32 %v153, %v61
    %v782 = vmul.f32 %v154, %v62
    %s783 = scalar_lea.vmem [#allocation5], 1152
    %v784 = vld [vmem:[%s783] sm:$0xff]
    %v785 = vld [vmem:[%s783 + $0x8] sm:$0xff]
    %v786 = vld [vmem:[%s783 + $0x10] sm:$0xff]
    %v787 = vld [vmem:[%s783 + $0x18] sm:$0xff]
    %v788 = vld [vmem:[%s783 + $0x20] sm:$0xff]
    %v789 = vld [vmem:[%s783 + $0x28] sm:$0xff]
    %v790 = vld [vmem:[%s783 + $0x30] sm:$0xff]
    %v791 = vld [vmem:[%s783 + $0x38] sm:$0xff]
    %v792 = vld [vmem:[%s783 + $0x40] sm:$0xff]
    %v793 = vld [vmem:[%s783 + $0x48] sm:$0xff]
    %v794 = vld [vmem:[%s783 + $0x50] sm:$0xff]
    %v795 = vld [vmem:[%s783 + $0x58] sm:$0xff]
    %v796 = vld [vmem:[%s783 + $0x60] sm:$0xff]
    %v797 = vld [vmem:[%s783 + $0x68] sm:$0xff]
    %v798 = vld [vmem:[%s783 + $0x70] sm:$0xff]
    %v799 = vld [vmem:[%s783 + $0x78] sm:$0xff]
    %v800 = vld [vmem:[%s783 + $0x80] sm:$0xff]
    %v801 = vld [vmem:[%s783 + $0x88] sm:$0xff]
    %v802 = vld [vmem:[%s783 + $0x90] sm:$0xff]
    %v803 = vld [vmem:[%s783 + $0x98] sm:$0xff]
    %v804 = vld [vmem:[%s783 + $0xa0] sm:$0xff]
    %v805 = vld [vmem:[%s783 + $0xa8] sm:$0xff]
    %v806 = vld [vmem:[%s783 + $0xb0] sm:$0xff]
    %v807 = vld [vmem:[%s783 + $0xb8] sm:$0xff]
    %v808 = vld [vmem:[%s783 + $0xc0] sm:$0xff]
    %v809 = vld [vmem:[%s783 + $0xc8] sm:$0xff]
    %v810 = vld [vmem:[%s783 + $0xd0] sm:$0xff]
    %v811 = vld [vmem:[%s783 + $0xd8] sm:$0xff]
    %v812 = vld [vmem:[%s783 + $0xe0] sm:$0xff]
    %v813 = vld [vmem:[%s783 + $0xe8] sm:$0xff]
    %v814 = vld [vmem:[%s783 + $0xf0] sm:$0xff]
    %v815 = vld [vmem:[%s783 + $0xf8] sm:$0xff]
    %v816 = vld [vmem:[%s783 + $0x100] sm:$0xff]
    %v817 = vld [vmem:[%s783 + $0x108] sm:$0xff]
    %v818 = vld [vmem:[%s783 + $0x110] sm:$0xff]
    %v819 = vld [vmem:[%s783 + $0x118] sm:$0xff]
    %v820 = vld [vmem:[%s783 + $0x120] sm:$0xff]
    %v821 = vld [vmem:[%s783 + $0x128] sm:$0xff]
    %v822 = vld [vmem:[%s783 + $0x130] sm:$0xff]
    %v823 = vld [vmem:[%s783 + $0x138] sm:$0xff]
    %v824 = vld [vmem:[%s783 + $0x140] sm:$0xff]
    %v825 = vld [vmem:[%s783 + $0x148] sm:$0xff]
    %v826 = vld [vmem:[%s783 + $0x150] sm:$0xff]
    %v827 = vld [vmem:[%s783 + $0x158] sm:$0xff]
    %v828 = vld [vmem:[%s783 + $0x160] sm:$0xff]
    %v829 = vld [vmem:[%s783 + $0x168] sm:$0xff]
    %v830 = vld [vmem:[%s783 + $0x170] sm:$0xff]
    %v831 = vld [vmem:[%s783 + $0x178] sm:$0xff]
    %v832 = vld [vmem:[%s783 + $0x180] sm:$0xff]
    %v833 = vld [vmem:[%s783 + $0x188] sm:$0xff]
    %v834 = vld [vmem:[%s783 + $0x190] sm:$0xff]
    %v835 = vld [vmem:[%s783 + $0x198] sm:$0xff]
    %v836 = vld [vmem:[%s783 + $0x1a0] sm:$0xff]
    %v837 = vld [vmem:[%s783 + $0x1a8] sm:$0xff]
    %v838 = vld [vmem:[%s783 + $0x1b0] sm:$0xff]
    %v839 = vld [vmem:[%s783 + $0x1b8] sm:$0xff]
    %v840 = vld [vmem:[%s783 + $0x1c0] sm:$0xff]
    %v841 = vld [vmem:[%s783 + $0x1c8] sm:$0xff]
    %v842 = vld [vmem:[%s783 + $0x1d0] sm:$0xff]
    %v843 = vld [vmem:[%s783 + $0x1d8] sm:$0xff]
    %v844 = vld [vmem:[%s783 + $0x1e0] sm:$0xff]
    %v845 = vld [vmem:[%s783 + $0x1e8] sm:$0xff]
    %v846 = vld [vmem:[%s783 + $0x1f0] sm:$0xff]
    %v847 = vld [vmem:[%s783 + $0x1f8] sm:$0xff]
    %v848 = vld [vmem:[%s783 + $0x200] sm:$0xff]
    %v849 = vld [vmem:[%s783 + $0x208] sm:$0xff]
    %v850 = vld [vmem:[%s783 + $0x210] sm:$0xff]
    %v851 = vld [vmem:[%s783 + $0x218] sm:$0xff]
    %v852 = vld [vmem:[%s783 + $0x220] sm:$0xff]
    %v853 = vld [vmem:[%s783 + $0x228] sm:$0xff]
    %v854 = vld [vmem:[%s783 + $0x230] sm:$0xff]
    %v855 = vld [vmem:[%s783 + $0x238] sm:$0xff]
    %v857 = vsel %vm228, %v767, 0
    %v860 = vsel %vm228, %v772, 0
    %v863 = vsel %vm228, %v777, 0
    %v866 = vsel %vm228, %v782, 0
    %868 = vmatprep.subr.mxu0 0.0
    %869 = vmatpush1.msra.mxu0 %v784
    %870 = vmatprep.subr.mxu0 0.0
    %871 = vmatpush1.msra.mxu0 %v785
    %872 = vmatprep.subr.mxu0 0.0
    %873 = vmatpush1.msra.mxu0 %v786
    %874 = vmatprep.subr.mxu0 0.0
    %875 = vmatpush1.msra.mxu0 %v787
    %876 = vmatprep.subr.mxu0 0.0
    %877 = vmatpush1.msra.mxu0 %v788
    %878 = vmatprep.subr.mxu0 0.0
    %879 = vmatpush1.msra.mxu0 %v789
    %880 = vmatprep.subr.mxu0 0.0
    %881 = vmatpush1.msra.mxu0 %v790
    %882 = vmatprep.subr.mxu0 0.0
    %883 = vmatpush1.msra.mxu0 %v791
    %884 = vmatprep.subr.mxu0 0.0
    %885 = vmatpush1.msra.mxu0 %v792
    %886 = vmatprep.subr.mxu0 0.0
    %887 = vmatpush1.msra.mxu0 %v793
    %888 = vmatprep.subr.mxu0 0.0
    %889 = vmatpush1.msra.mxu0 %v794
    %890 = vmatprep.subr.mxu0 0.0
    %891 = vmatpush1.msra.mxu0 %v795
    %892 = vmatprep.subr.mxu0 0.0
    %893 = vmatpush1.msra.mxu0 %v796
    %894 = vmatprep.subr.mxu0 0.0
    %895 = vmatpush1.msra.mxu0 %v797
    %896 = vmatprep.subr.mxu0 0.0
    %897 = vmatpush1.msra.mxu0 %v798
    %898 = vmatprep.subr.mxu0 0.0
    %899 = vmatpush1.msra.mxu0 %v799
    %900 = vmatprep.subr.mxu0 0.0
    %901 = vmatpush1.msra.mxu0 %v800
    %902 = vmatprep.subr.mxu0 0.0
    %903 = vmatpush1.msra.mxu0 %v801
    %904 = vmatprep.subr.mxu0 0.0
    %905 = vmatpush1.msra.mxu0 %v802
    %906 = vmatprep.subr.mxu0 0.0
    %907 = vmatpush1.msra.mxu0 %v803
    %908 = vmatprep.subr.mxu0 0.0
    %909 = vmatpush1.msra.mxu0 %v804
    %910 = vmatprep.subr.mxu0 0.0
    %911 = vmatpush1.msra.mxu0 %v805
    %912 = vmatprep.subr.mxu0 0.0
    %913 = vmatpush1.msra.mxu0 %v806
    %914 = vmatprep.subr.mxu0 0.0
    %915 = vmatpush1.msra.mxu0 %v807
    %916 = vmatprep.subr.mxu0 0.0
    %917 = vmatpush1.msra.mxu0 %v808
    %918 = vmatprep.subr.mxu0 0.0
    %919 = vmatpush1.msra.mxu0 %v809
    %920 = vmatprep.subr.mxu0 0.0
    %921 = vmatpush1.msra.mxu0 %v810
    %922 = vmatprep.subr.mxu0 0.0
    %923 = vmatpush1.msra.mxu0 %v811
    %924 = vmatprep.subr.mxu0 0.0
    %925 = vmatpush1.msra.mxu0 %v812
    %926 = vmatprep.subr.mxu0 0.0
    %927 = vmatpush1.msra.mxu0 %v813
    %928 = vmatprep.subr.mxu0 0.0
    %929 = vmatpush1.msra.mxu0 %v814
    %930 = vmatprep.subr.mxu0 0.0
    %931 = vmatpush1.msra.mxu0 %v815
    %932 = vmatprep.mubr.f32.mxu0 %v764
    %933 = vmatmul.mubr.f32.gmra.mrb[0].mxu0 %v763
    %v934 = vpop.f32.mrb[0].mxu0
    %v935 = vadd.f32 0.0, %v934
    %v936 = vpop.f32.mrb[0].mxu0
    %937 = vmatprep.mubr.f32.mxu0 %v769
    %938 = vmatmul.mubr.f32.gmra.mrb[0].mxu0 %v768
    %v939 = vpop.f32.mrb[0].mxu0
    %v940 = vadd.f32 0.0, %v939
    %v941 = vpop.f32.mrb[0].mxu0
    %942 = vmatprep.mubr.f32.mxu0 %v774
    %943 = vmatmul.mubr.f32.gmra.mrb[0].mxu0 %v773
    %v944 = vpop.f32.mrb[0].mxu0
    %v945 = vadd.f32 0.0, %v944
    %v946 = vpop.f32.mrb[0].mxu0
    %947 = vmatprep.mubr.f32.mxu0 %v779
    %948 = vmatmul.mubr.f32.gmra.mrb[0].mxu0 %v778
    %v949 = vpop.f32.mrb[0].mxu0
    %v950 = vadd.f32 0.0, %v949
    %v951 = vpop.f32.mrb[0].mxu0
    %952 = vdwg.mxu0
    %953 = vmatprep.subr.mxu0 0.0
    %954 = vmatpush1.msra.mxu0 %v816
    %955 = vmatprep.subr.mxu0 0.0
    %956 = vmatpush1.msra.mxu0 %v817
    %957 = vmatprep.subr.mxu0 0.0
    %958 = vmatpush1.msra.mxu0 %v818
    %959 = vmatprep.subr.mxu0 0.0
    %960 = vmatpush1.msra.mxu0 %v819
    %961 = vmatprep.subr.mxu0 0.0
    %962 = vmatpush1.msra.mxu0 %v820
    %963 = vmatprep.subr.mxu0 0.0
    %964 = vmatpush1.msra.mxu0 %v821
    %965 = vmatprep.subr.mxu0 0.0
    %966 = vmatpush1.msra.mxu0 %v822
    %967 = vmatprep.subr.mxu0 0.0
    %968 = vmatpush1.msra.mxu0 %v823
    %969 = vmatprep.subr.mxu0 0.0
    %970 = vmatpush1.msra.mxu0 %v824
    %971 = vmatprep.subr.mxu0 0.0
    %972 = vmatpush1.msra.mxu0 %v825
    %973 = vmatprep.subr.mxu0 0.0
    %974 = vmatpush1.msra.mxu0 %v826
    %975 = vmatprep.subr.mxu0 0.0
    %976 = vmatpush1.msra.mxu0 %v827
    %977 = vmatprep.subr.mxu0 0.0
    %978 = vmatpush1.msra.mxu0 %v828
    %979 = vmatprep.subr.mxu0 0.0
    %980 = vmatpush1.msra.mxu0 %v829
    %981 = vmatprep.subr.mxu0 0.0
    %982 = vmatpush1.msra.mxu0 %v830
    %983 = vmatprep.subr.mxu0 0.0
    %984 = vmatpush1.msra.mxu0 %v831
    %985 = vmatprep.subr.mxu0 0.0
    %986 = vmatpush1.msra.mxu0 %v832
    %987 = vmatprep.subr.mxu0 0.0
    %988 = vmatpush1.msra.mxu0 %v833
    %989 = vmatprep.subr.mxu0 0.0
    %990 = vmatpush1.msra.mxu0 %v834
    %991 = vmatprep.subr.mxu0 0.0
    %992 = vmatpush1.msra.mxu0 %v835
    %993 = vmatprep.subr.mxu0 0.0
    %994 = vmatpush1.msra.mxu0 %v836
    %995 = vmatprep.subr.mxu0 0.0
    %996 = vmatpush1.msra.mxu0 %v837
    %997 = vmatprep.subr.mxu0 0.0
    %998 = vmatpush1.msra.mxu0 %v838
    %999 = vmatprep.subr.mxu0 0.0
    %1000 = vmatpush1.msra.mxu0 %v839
    %1001 = vmatprep.subr.mxu0 0.0
    %1002 = vmatpush1.msra.mxu0 %v840
    %1003 = vmatprep.subr.mxu0 0.0
    %1004 = vmatpush1.msra.mxu0 %v841
    %1005 = vmatprep.subr.mxu0 0.0
    %1006 = vmatpush1.msra.mxu0 %v842
    %1007 = vmatprep.subr.mxu0 0.0
    %1008 = vmatpush1.msra.mxu0 %v843
    %1009 = vmatprep.subr.mxu0 0.0
    %1010 = vmatpush1.msra.mxu0 %v844
    %1011 = vmatprep.subr.mxu0 0.0
    %1012 = vmatpush1.msra.mxu0 %v845
    %1013 = vmatprep.subr.mxu0 0.0
    %1014 = vmatpush1.msra.mxu0 %v846
    %1015 = vmatprep.subr.mxu0 0.0
    %1016 = vmatpush1.msra.mxu0 %v847
    %1017 = vmatprep.mubr.f32.mxu0 %v766
    %1018 = vmatmul.mubr.f32.gmra.mrb[0].mxu0 %v765
    %v1019 = vpop.f32.mrb[0].mxu0
    %v1020 = vadd.f32 %v935, %v1019
    %v1021 = vpop.f32.mrb[0].mxu0
    %1022 = vmatprep.mubr.f32.mxu0 %v771
    %1023 = vmatmul.mubr.f32.gmra.mrb[0].mxu0 %v770
    %v1024 = vpop.f32.mrb[0].mxu0
    %v1025 = vadd.f32 %v940, %v1024
    %v1026 = vpop.f32.mrb[0].mxu0
    %1027 = vmatprep.mubr.f32.mxu0 %v776
    %1028 = vmatmul.mubr.f32.gmra.mrb[0].mxu0 %v775
    %v1029 = vpop.f32.mrb[0].mxu0
    %v1030 = vadd.f32 %v945, %v1029
    %v1031 = vpop.f32.mrb[0].mxu0
    %1032 = vmatprep.mubr.f32.mxu0 %v781
    %1033 = vmatmul.mubr.f32.gmra.mrb[0].mxu0 %v780
    %v1034 = vpop.f32.mrb[0].mxu0
    %v1035 = vadd.f32 %v950, %v1034
    %v1036 = vpop.f32.mrb[0].mxu0
    %1037 = vdwg.mxu0
    %1038 = vmatprep.subr.mxu0 0.0
    %1039 = vmatpush1.msra.mxu0 %v848
    %1040 = vmatprep.subr.mxu0 0.0
    %1041 = vmatpush1.msra.mxu0 %v849
    %1042 = vmatprep.subr.mxu0 0.0
    %1043 = vmatpush1.msra.mxu0 %v850
    %1044 = vmatprep.subr.mxu0 0.0
    %1045 = vmatpush1.msra.mxu0 %v851
    %1046 = vmatprep.subr.mxu0 0.0
    %1047 = vmatpush1.msra.mxu0 %v852
    %1048 = vmatprep.subr.mxu0 0.0
    %1049 = vmatpush1.msra.mxu0 %v853
    %1050 = vmatprep.subr.mxu0 0.0
    %1051 = vmatpush1.msra.mxu0 %v854
    %1052 = vmatprep.subr.mxu0 0.0
    %1053 = vmatpush1.msra.mxu0 %v855
    %1054 = vmatprep.subr.mxu0 0.0
    %1055 = vmatpush1.msra.mxu0 0.0
    %1056 = vmatprep.subr.mxu0 0.0
    %1057 = vmatpush1.msra.mxu0 0.0
    %1058 = vmatprep.subr.mxu0 0.0
    %1059 = vmatpush1.msra.mxu0 0.0
    %1060 = vmatprep.subr.mxu0 0.0
    %1061 = vmatpush1.msra.mxu0 0.0
    %1062 = vmatprep.subr.mxu0 0.0
    %1063 = vmatpush1.msra.mxu0 0.0
    %1064 = vmatprep.subr.mxu0 0.0
    %1065 = vmatpush1.msra.mxu0 0.0
    %1066 = vmatprep.subr.mxu0 0.0
    %1067 = vmatpush1.msra.mxu0 0.0
    %1068 = vmatprep.subr.mxu0 0.0
    %1069 = vmatpush1.msra.mxu0 0.0
    %1070 = vmatprep.subr.mxu0 0.0
    %1071 = vmatpush1.msra.mxu0 0.0
    %1072 = vmatprep.subr.mxu0 0.0
    %1073 = vmatpush1.msra.mxu0 0.0
    %1074 = vmatprep.subr.mxu0 0.0
    %1075 = vmatpush1.msra.mxu0 0.0
    %1076 = vmatprep.subr.mxu0 0.0
    %1077 = vmatpush1.msra.mxu0 0.0
    %1078 = vmatprep.subr.mxu0 0.0
    %1079 = vmatpush1.msra.mxu0 0.0
    %1080 = vmatprep.subr.mxu0 0.0
    %1081 = vmatpush1.msra.mxu0 0.0
    %1082 = vmatprep.subr.mxu0 0.0
    %1083 = vmatpush1.msra.mxu0 0.0
    %1084 = vmatprep.subr.mxu0 0.0
    %1085 = vmatpush1.msra.mxu0 0.0
    %1086 = vmatprep.subr.mxu0 0.0
    %1087 = vmatpush1.msra.mxu0 0.0
    %1088 = vmatprep.subr.mxu0 0.0
    %1089 = vmatpush1.msra.mxu0 0.0
    %1090 = vmatprep.subr.mxu0 0.0
    %1091 = vmatpush1.msra.mxu0 0.0
    %1092 = vmatprep.subr.mxu0 0.0
    %1093 = vmatpush1.msra.mxu0 0.0
    %1094 = vmatprep.subr.mxu0 0.0
    %1095 = vmatpush1.msra.mxu0 0.0
    %1096 = vmatprep.subr.mxu0 0.0
    %1097 = vmatpush1.msra.mxu0 0.0
    %1098 = vmatprep.subr.mxu0 0.0
    %1099 = vmatpush1.msra.mxu0 0.0
    %1100 = vmatprep.subr.mxu0 0.0
    %1101 = vmatpush1.msra.mxu0 0.0
    %1102 = vmatprep.mubr.f32.mxu0 0.0
    %1103 = vmatmul.mubr.f32.gmra.mrb[0].mxu0 %v857
    %v1104 = vpop.f32.mrb[0].mxu0
    %v1105 = vadd.f32 %v1020, %v1104
    %v1106 = vpop.f32.mrb[0].mxu0
    %1107 = vmatprep.mubr.f32.mxu0 0.0
    %1108 = vmatmul.mubr.f32.gmra.mrb[0].mxu0 %v860
    %v1109 = vpop.f32.mrb[0].mxu0
    %v1110 = vadd.f32 %v1025, %v1109
    %v1111 = vpop.f32.mrb[0].mxu0
    %1112 = vmatprep.mubr.f32.mxu0 0.0
    %1113 = vmatmul.mubr.f32.gmra.mrb[0].mxu0 %v863
    %v1114 = vpop.f32.mrb[0].mxu0
    %v1115 = vadd.f32 %v1030, %v1114
    %v1116 = vpop.f32.mrb[0].mxu0
    %1117 = vmatprep.mubr.f32.mxu0 0.0
    %1118 = vmatmul.mubr.f32.gmra.mrb[0].mxu0 %v866
    %v1119 = vpop.f32.mrb[0].mxu0
    %v1120 = vadd.f32 %v1035, %v1119
    %v1121 = vpop.f32.mrb[0].mxu0
    %1122 = vdwg.mxu0
    %v1123 = vadd.f32 %v745, %v1105
    %v1124 = vadd.f32 %v750, %v1110
    %v1125 = vadd.f32 %v755, %v1115
    %v1126 = vadd.f32 %v760, %v1120
    %v1127 = vld [vmem:[%s2] sm:$0x1]
    %v1129 = vlaneseq
    %v1130 = vshrl.u32 %v1129, 7
    %v1131 = vsub.s32 0, %v1130
    %v1132 = vrot.slane %v1127, %v1131
    %v1134 = vadd.f32 %v1123, %v1132
    %v1135 = vadd.f32 %v1124, %v1132
    %v1136 = vadd.f32 %v1125, %v1132
    %v1137 = vadd.f32 %v1126, %v1132
    %1138 = vst [vmem:[#allocation7] sm:$0xff] %v1134
    %1139 = vst [vmem:[#allocation7 + $0x8] sm:$0xff] %v1135
    %1140 = vst [vmem:[#allocation7 + $0x10] sm:$0xff] %v1136
    %1141 = vst [vmem:[#allocation7 + $0x18] sm:$0xff] %v1137
    // Predicated region
    $region22: #{tpu_custom_call.1} parent=1 // pred_check
      _
    $region23: #{tpu_custom_call.1} parent=1 // pred_check_branch
      %1143 = sbr.rel (0) target = $region25
    $region24: #{tpu_custom_call.1} parent=1 // pred_region
      %s1145 = ssub.s32 512, 512
      %1146 = vsyncadd [#allocation4], %s1145
      %s1147 = sshll.u32 [#allocation7], 4
      %s1148 = int_to_ptr.vmem [resolvable:$true] %s1147
      %1153 = dma.vmem_to_hbm [thread:$0]  %s1148, 512, %s3, [#allocation4], 128, 128, 8
    $region25: #{tpu_custom_call.1} parent=1 // pred_fallthru
      _
    // Predicated region
    $region26: #{tpu_custom_call.1} parent=1 // pred_check
      _
    $region27: #{tpu_custom_call.1} parent=1 // pred_check_branch
      %1155 = sbr.rel (0) target = $region29
    $region28: #{tpu_custom_call.1} parent=1 // pred_region
      %1156 = dma.done [#allocation4], 512
    $region29: #{tpu_custom_call.1} parent=1 // pred_fallthru
      _
    %1157 = vsyncpa [#allocation3], 1
    %1158 = vsyncpa [#allocation6], 1
    %1159 = vsyncpa [#allocation4], 1

</llo_original>
